<compile_context>
chip_gen: v7x
topology: tpu7x:2x2x1
jax: 0.10.0
libtpu: 0.0.40
codegen_flags: <defaults>
</compile_context>

<pallas_src>
import functools

import jax
import jax.numpy as jnp
from jax import lax
from jax.experimental import pallas as pl
from jax.experimental.pallas import tpu as pltpu


BLOCK_N = 128  # images per grid step; batch rides the 128-wide lane axis


# ----------------------------------------------------------------------------
# Fused kernel: conv1 -> relu -> conv2 -> relu -> maxpool2x2 -> flatten -> fc1
# One grid step processes BLOCK_N images (batch on lanes) and writes one
# lane-dense (BLOCK_N, 128) output block with a single store.
# ----------------------------------------------------------------------------
def _fused_kernel(x_ref, w1_ref, b1_ref, w2_ref, b2_ref, wfc_ref, bfc_ref,
                  out_ref, rm_ref, pf_ref):
    H, W, Nb = x_ref.shape
    H1, W1 = H - 2, W - 2
    H2, W2 = H1 - 2, W1 - 2
    P, Q = H2 // 2, W2 // 2

    x = x_ref[...]                                       # (H, W, Nb), f32

    # ---- conv1 (1->1 ch, 3x3, VALID) + bias + relu.  Taps shift the leading
    # (H) and sublane (W) axes only; every op is a full-lane VPU op.
    y1 = x[0:H1, 0:W1, :] * w1_ref[0]
    for t in range(1, 9):
        di, dj = divmod(t, 3)
        y1 = y1 + x[di:di + H1, dj:dj + W1, :] * w1_ref[t]
    y1 = jnp.maximum(y1 + b1_ref[0], 0.0)                # (H1, W1, Nb)

    # ---- conv2 (3x3, VALID) + bias + relu
    y2 = y1[0:H2, 0:W2, :] * w2_ref[0]
    for t in range(1, 9):
        di, dj = divmod(t, 3)
        y2 = y2 + y1[di:di + H2, dj:dj + W2, :] * w2_ref[t]
    y2 = jnp.maximum(y2 + b2_ref[0], 0.0)                # (H2, W2, Nb)

    # ---- 2x2 max pool, stride 2 (floor), entirely on the VPU.
    # Rows: split the leading axis into (P, 2) (layout-trivial: last two dims
    # unchanged) and max the pair.
    y2r = y2[0:2 * P].reshape(P, 2, W2, Nb)
    rm_ref[...] = jnp.maximum(y2r[:, 0], y2r[:, 1])      # (P, W2, Nb)
    # Columns: even/odd sublane-strided loads from VMEM scratch.
    pooled = jnp.maximum(rm_ref[:, pl.ds(0, Q, 2), :],
                         rm_ref[:, pl.ds(1, Q, 2), :])   # (P, Q, Nb)

    # ---- flatten in torch.flatten(x, 1) order: f = p*Q + q, into (F, Nb).
    for p in range(P):
        pf_ref[p * Q:(p + 1) * Q, :] = pooled[p]

    # ---- fc1: one (Nb, F) @ (F, O) contraction on the MXU (lhs contracted on
    # its leading dim), bias added once, single unmasked (Nb, 128) store.
    out = lax.dot_general(pf_ref[...], wfc_ref[...],
                          dimension_numbers=(((0,), (0,)), ((), ())),
                          preferred_element_type=jnp.float32)   # (Nb, O)
    out_ref[...] = out + bfc_ref[...]


@functools.partial(jax.jit, static_argnames=("block_n",))
def _embed_batch(xb, params, *, block_n=BLOCK_N):
    """xb: (B, H, W) f32 -> (B, 128) f32 embeddings."""
    w1, b1, w2, b2, wfc, bfc = params
    B, H, W = xb.shape
    H1, W1 = H - 2, W - 2
    H2, W2 = H1 - 2, W1 - 2
    P, Q = H2 // 2, W2 // 2
    F = P * Q
    O = wfc.shape[1]
    assert wfc.shape[0] == F, "fc1 weight must be (F, 128) with F=((H-4)//2)*((W-4)//2)"
    assert block_n % 128 == 0, "batch rides the lane axis; block_n must be a multiple of 128"

    # Batch-on-lanes layout: (B, H, W) -> (H, W, B), pad batch to block_n.
    xt = jnp.transpose(xb, (1, 2, 0))
    Bp = pl.cdiv(B, block_n) * block_n
    if Bp != B:
        xt = jnp.pad(xt, ((0, 0), (0, 0), (0, Bp - B)))

    out = pl.pallas_call(
        _fused_kernel,
        out_shape=jax.ShapeDtypeStruct((Bp, O), jnp.float32),
        grid=(Bp // block_n,),
        in_specs=[
            pl.BlockSpec((H, W, block_n), lambda b: (0, 0, b)),        # x block
            pl.BlockSpec(memory_space=pltpu.MemorySpace.SMEM),         # w1 (9,)
            pl.BlockSpec(memory_space=pltpu.MemorySpace.SMEM),         # b1 (1,)
            pl.BlockSpec(memory_space=pltpu.MemorySpace.SMEM),         # w2 (9,)
            pl.BlockSpec(memory_space=pltpu.MemorySpace.SMEM),         # b2 (1,)
            pl.BlockSpec((F, O), lambda b: (0, 0)),                    # fc1 weight (resident)
            pl.BlockSpec((1, O), lambda b: (0, 0)),                    # fc1 bias (resident)
        ],
        out_specs=pl.BlockSpec((block_n, O), lambda b: (b, 0)),
        scratch_shapes=[
            pltpu.VMEM((P, W2, block_n), jnp.float32),                 # row-pooled
            pltpu.VMEM((F, block_n), jnp.float32),                     # flattened features
        ],
        compiler_params=pltpu.CompilerParams(
            dimension_semantics=("parallel",)),                        # v7x: 2 TCs
    )(xt, w1.reshape(-1), b1, w2.reshape(-1), b2, wfc, bfc)
    return out[:B]


def forward_once(x, params):
    """x: (N, H, W) f32 -> (N, 128) f32. Mirrors Net.forward_once (minus timing)."""
    return _embed_batch(x, params)


def net_forward(x1, x2, params):
    """Net.forward: one fused launch over [x1; x2], then split."""
    n1 = x1.shape[0]
    xb = jnp.concatenate([x1, x2], axis=0)
    out = _embed_batch(xb, params)
    return out[:n1], out[n1:]


# ----------------------------------------------------------------------------
# Pure-JAX reference (correctness check only)
# ----------------------------------------------------------------------------
def ref_forward_once(x, params):
    w1, b1, w2, b2, wfc, bfc = params

    def conv3(img, w, b):
        return lax.conv_general_dilated(
            img, w[None, None, :, :], (1, 1), "VALID") + b

    y = x[:, None, :, :]
    y = jax.nn.relu(conv3(y, w1, b1[0]))
    y = jax.nn.relu(conv3(y, w2, b2[0]))
    N, _, H2, W2 = y.shape
    P, Q = H2 // 2, W2 // 2
    y = y[:, 0, :2 * P, :2 * Q].reshape(N, P, 2, Q, 2).max(axis=(2, 4))
    return y.reshape(N, P * Q) @ wfc + bfc


if __name__ == "__main__":
    N, H, W = 2, 16, 16
    P, Q = (H - 4) // 2, (W - 4) // 2
    F, O = P * Q, 128

    key = jax.random.PRNGKey(0)
    ks = jax.random.split(key, 8)
    x1 = jax.random.normal(ks[0], (N, H, W), jnp.float32)
    x2 = jax.random.normal(ks[1], (N, H, W), jnp.float32)

    # Synthetic parameters (shapes from Net.__init__; Conv2d(1,1,3) weights are
    # (1,1,3,3) -> stored as (3,3); fc1 weight stored pre-transposed as (F, 128)).
    w1 = jax.random.normal(ks[2], (3, 3), jnp.float32) * 0.3
    b1 = jax.random.normal(ks[3], (1,), jnp.float32) * 0.1
    w2 = jax.random.normal(ks[4], (3, 3), jnp.float32) * 0.3
    b2 = jax.random.normal(ks[5], (1,), jnp.float32) * 0.1
    wfc = jax.random.normal(ks[6], (F, O), jnp.float32) / jnp.sqrt(float(F))
    bfc = jax.random.normal(ks[7], (1, O), jnp.float32) * 0.1
    params = (w1, b1, w2, b2, wfc, bfc)

    out1, out2 = net_forward(x1, x2, params)
    jax.block_until_ready((out1, out2))

    ref1 = ref_forward_once(x1, params)
    ref2 = ref_forward_once(x2, params)
    assert out1.shape == (N, O) and out2.shape == (N, O)
    assert jnp.allclose(out1, ref1, atol=1e-3, rtol=1e-3)
    assert jnp.allclose(out2, ref2, atol=1e-3, rtol=1e-3)

    print("KERNEL_OK")
</pallas_src>

<mosaic_0001>
module attributes {stable_mosaic.version = 11 : i64} {
  func.func @_fused_kernel(%arg0: i32, %arg1: memref<16x16x128xf32, #tpu.memory_space<vmem>>, %arg2: memref<9xf32, #tpu.memory_space<smem>>, %arg3: memref<1xf32, #tpu.memory_space<smem>>, %arg4: memref<9xf32, #tpu.memory_space<smem>>, %arg5: memref<1xf32, #tpu.memory_space<smem>>, %arg6: memref<36x128xf32, #tpu.memory_space<vmem>>, %arg7: memref<1x128xf32, #tpu.memory_space<vmem>>, %arg8: memref<128x128xf32, #tpu.memory_space<vmem>>, %arg9: memref<6x12x128xf32, #tpu.memory_space<vmem>>, %arg10: memref<36x128xf32, #tpu.memory_space<vmem>>) attributes {dimension_semantics = [#tpu.dimension_semantics<parallel>], iteration_bounds = array<i64: 1>, scalar_prefetch = 0 : i64, scratch_operands = 2 : i64, tpu.core_type = #tpu.core_type<tc>, window_params = [{transform_indices = @transform_0, window_bounds = array<i64: 16, 16, 128>}, {transform_indices = @transform_1, window_bounds = array<i64: 9>}, {transform_indices = @transform_2, window_bounds = array<i64: 1>}, {transform_indices = @transform_3, window_bounds = array<i64: 9>}, {transform_indices = @transform_4, window_bounds = array<i64: 1>}, {pipeline_mode = #tpu.pipeline_mode<synchronous>, transform_indices = @transform_5, window_bounds = array<i64: 36, 128>}, {pipeline_mode = #tpu.pipeline_mode<synchronous>, transform_indices = @transform_6, window_bounds = array<i64: 1, 128>}, {transform_indices = @transform_7, window_bounds = array<i64: 128, 128>}]} {
    %c0 = arith.constant 0 : index
    %c0_0 = arith.constant 0 : index
    %c0_1 = arith.constant 0 : index
    %0 = vector.load %arg1[%c0, %c0_0, %c0_1] : memref<16x16x128xf32, #tpu.memory_space<vmem>>, vector<16x16x128xf32>
    %1 = vector.extract_strided_slice %0 {offsets = [0, 0, 0], sizes = [14, 14, 128], strides = [1, 1, 1]} : vector<16x16x128xf32> to vector<14x14x128xf32>
    %c0_2 = arith.constant 0 : index
    %2 = memref.load %arg2[%c0_2] : memref<9xf32, #tpu.memory_space<smem>>
    %3 = vector.broadcast %2 : f32 to vector<14x14x128xf32>
    %4 = arith.mulf %1, %3 : vector<14x14x128xf32>
    %5 = vector.extract_strided_slice %0 {offsets = [0, 1, 0], sizes = [14, 14, 128], strides = [1, 1, 1]} : vector<16x16x128xf32> to vector<14x14x128xf32>
    %c1 = arith.constant 1 : index
    %6 = memref.load %arg2[%c1] : memref<9xf32, #tpu.memory_space<smem>>
    %7 = vector.broadcast %6 : f32 to vector<14x14x128xf32>
    %8 = arith.mulf %5, %7 : vector<14x14x128xf32>
    %9 = arith.addf %4, %8 : vector<14x14x128xf32>
    %10 = vector.extract_strided_slice %0 {offsets = [0, 2, 0], sizes = [14, 14, 128], strides = [1, 1, 1]} : vector<16x16x128xf32> to vector<14x14x128xf32>
    %c2 = arith.constant 2 : index
    %11 = memref.load %arg2[%c2] : memref<9xf32, #tpu.memory_space<smem>>
    %12 = vector.broadcast %11 : f32 to vector<14x14x128xf32>
    %13 = arith.mulf %10, %12 : vector<14x14x128xf32>
    %14 = arith.addf %9, %13 : vector<14x14x128xf32>
    %15 = vector.extract_strided_slice %0 {offsets = [1, 0, 0], sizes = [14, 14, 128], strides = [1, 1, 1]} : vector<16x16x128xf32> to vector<14x14x128xf32>
    %c3 = arith.constant 3 : index
    %16 = memref.load %arg2[%c3] : memref<9xf32, #tpu.memory_space<smem>>
    %17 = vector.broadcast %16 : f32 to vector<14x14x128xf32>
    %18 = arith.mulf %15, %17 : vector<14x14x128xf32>
    %19 = arith.addf %14, %18 : vector<14x14x128xf32>
    %20 = vector.extract_strided_slice %0 {offsets = [1, 1, 0], sizes = [14, 14, 128], strides = [1, 1, 1]} : vector<16x16x128xf32> to vector<14x14x128xf32>
    %c4 = arith.constant 4 : index
    %21 = memref.load %arg2[%c4] : memref<9xf32, #tpu.memory_space<smem>>
    %22 = vector.broadcast %21 : f32 to vector<14x14x128xf32>
    %23 = arith.mulf %20, %22 : vector<14x14x128xf32>
    %24 = arith.addf %19, %23 : vector<14x14x128xf32>
    %25 = vector.extract_strided_slice %0 {offsets = [1, 2, 0], sizes = [14, 14, 128], strides = [1, 1, 1]} : vector<16x16x128xf32> to vector<14x14x128xf32>
    %c5 = arith.constant 5 : index
    %26 = memref.load %arg2[%c5] : memref<9xf32, #tpu.memory_space<smem>>
    %27 = vector.broadcast %26 : f32 to vector<14x14x128xf32>
    %28 = arith.mulf %25, %27 : vector<14x14x128xf32>
    %29 = arith.addf %24, %28 : vector<14x14x128xf32>
    %30 = vector.extract_strided_slice %0 {offsets = [2, 0, 0], sizes = [14, 14, 128], strides = [1, 1, 1]} : vector<16x16x128xf32> to vector<14x14x128xf32>
    %c6 = arith.constant 6 : index
    %31 = memref.load %arg2[%c6] : memref<9xf32, #tpu.memory_space<smem>>
    %32 = vector.broadcast %31 : f32 to vector<14x14x128xf32>
    %33 = arith.mulf %30, %32 : vector<14x14x128xf32>
    %34 = arith.addf %29, %33 : vector<14x14x128xf32>
    %35 = vector.extract_strided_slice %0 {offsets = [2, 1, 0], sizes = [14, 14, 128], strides = [1, 1, 1]} : vector<16x16x128xf32> to vector<14x14x128xf32>
    %c7 = arith.constant 7 : index
    %36 = memref.load %arg2[%c7] : memref<9xf32, #tpu.memory_space<smem>>
    %37 = vector.broadcast %36 : f32 to vector<14x14x128xf32>
    %38 = arith.mulf %35, %37 : vector<14x14x128xf32>
    %39 = arith.addf %34, %38 : vector<14x14x128xf32>
    %40 = vector.extract_strided_slice %0 {offsets = [2, 2, 0], sizes = [14, 14, 128], strides = [1, 1, 1]} : vector<16x16x128xf32> to vector<14x14x128xf32>
    %c8 = arith.constant 8 : index
    %41 = memref.load %arg2[%c8] : memref<9xf32, #tpu.memory_space<smem>>
    %42 = vector.broadcast %41 : f32 to vector<14x14x128xf32>
    %43 = arith.mulf %40, %42 : vector<14x14x128xf32>
    %44 = arith.addf %39, %43 : vector<14x14x128xf32>
    %c0_3 = arith.constant 0 : index
    %45 = memref.load %arg3[%c0_3] : memref<1xf32, #tpu.memory_space<smem>>
    %46 = vector.broadcast %45 : f32 to vector<14x14x128xf32>
    %47 = arith.addf %44, %46 : vector<14x14x128xf32>
    %cst = arith.constant 0.000000e+00 : f32
    %48 = vector.broadcast %cst : f32 to vector<14x14x128xf32>
    %49 = arith.maximumf %47, %48 : vector<14x14x128xf32>
    %50 = vector.extract_strided_slice %49 {offsets = [0, 0, 0], sizes = [12, 12, 128], strides = [1, 1, 1]} : vector<14x14x128xf32> to vector<12x12x128xf32>
    %c0_4 = arith.constant 0 : index
    %51 = memref.load %arg4[%c0_4] : memref<9xf32, #tpu.memory_space<smem>>
    %52 = vector.broadcast %51 : f32 to vector<12x12x128xf32>
    %53 = arith.mulf %50, %52 : vector<12x12x128xf32>
    %54 = vector.extract_strided_slice %49 {offsets = [0, 1, 0], sizes = [12, 12, 128], strides = [1, 1, 1]} : vector<14x14x128xf32> to vector<12x12x128xf32>
    %c1_5 = arith.constant 1 : index
    %55 = memref.load %arg4[%c1_5] : memref<9xf32, #tpu.memory_space<smem>>
    %56 = vector.broadcast %55 : f32 to vector<12x12x128xf32>
    %57 = arith.mulf %54, %56 : vector<12x12x128xf32>
    %58 = arith.addf %53, %57 : vector<12x12x128xf32>
    %59 = vector.extract_strided_slice %49 {offsets = [0, 2, 0], sizes = [12, 12, 128], strides = [1, 1, 1]} : vector<14x14x128xf32> to vector<12x12x128xf32>
    %c2_6 = arith.constant 2 : index
    %60 = memref.load %arg4[%c2_6] : memref<9xf32, #tpu.memory_space<smem>>
    %61 = vector.broadcast %60 : f32 to vector<12x12x128xf32>
    %62 = arith.mulf %59, %61 : vector<12x12x128xf32>
    %63 = arith.addf %58, %62 : vector<12x12x128xf32>
    %64 = vector.extract_strided_slice %49 {offsets = [1, 0, 0], sizes = [12, 12, 128], strides = [1, 1, 1]} : vector<14x14x128xf32> to vector<12x12x128xf32>
    %c3_7 = arith.constant 3 : index
    %65 = memref.load %arg4[%c3_7] : memref<9xf32, #tpu.memory_space<smem>>
    %66 = vector.broadcast %65 : f32 to vector<12x12x128xf32>
    %67 = arith.mulf %64, %66 : vector<12x12x128xf32>
    %68 = arith.addf %63, %67 : vector<12x12x128xf32>
    %69 = vector.extract_strided_slice %49 {offsets = [1, 1, 0], sizes = [12, 12, 128], strides = [1, 1, 1]} : vector<14x14x128xf32> to vector<12x12x128xf32>
    %c4_8 = arith.constant 4 : index
    %70 = memref.load %arg4[%c4_8] : memref<9xf32, #tpu.memory_space<smem>>
    %71 = vector.broadcast %70 : f32 to vector<12x12x128xf32>
    %72 = arith.mulf %69, %71 : vector<12x12x128xf32>
    %73 = arith.addf %68, %72 : vector<12x12x128xf32>
    %74 = vector.extract_strided_slice %49 {offsets = [1, 2, 0], sizes = [12, 12, 128], strides = [1, 1, 1]} : vector<14x14x128xf32> to vector<12x12x128xf32>
    %c5_9 = arith.constant 5 : index
    %75 = memref.load %arg4[%c5_9] : memref<9xf32, #tpu.memory_space<smem>>
    %76 = vector.broadcast %75 : f32 to vector<12x12x128xf32>
    %77 = arith.mulf %74, %76 : vector<12x12x128xf32>
    %78 = arith.addf %73, %77 : vector<12x12x128xf32>
    %79 = vector.extract_strided_slice %49 {offsets = [2, 0, 0], sizes = [12, 12, 128], strides = [1, 1, 1]} : vector<14x14x128xf32> to vector<12x12x128xf32>
    %c6_10 = arith.constant 6 : index
    %80 = memref.load %arg4[%c6_10] : memref<9xf32, #tpu.memory_space<smem>>
    %81 = vector.broadcast %80 : f32 to vector<12x12x128xf32>
    %82 = arith.mulf %79, %81 : vector<12x12x128xf32>
    %83 = arith.addf %78, %82 : vector<12x12x128xf32>
    %84 = vector.extract_strided_slice %49 {offsets = [2, 1, 0], sizes = [12, 12, 128], strides = [1, 1, 1]} : vector<14x14x128xf32> to vector<12x12x128xf32>
    %c7_11 = arith.constant 7 : index
    %85 = memref.load %arg4[%c7_11] : memref<9xf32, #tpu.memory_space<smem>>
    %86 = vector.broadcast %85 : f32 to vector<12x12x128xf32>
    %87 = arith.mulf %84, %86 : vector<12x12x128xf32>
    %88 = arith.addf %83, %87 : vector<12x12x128xf32>
    %89 = vector.extract_strided_slice %49 {offsets = [2, 2, 0], sizes = [12, 12, 128], strides = [1, 1, 1]} : vector<14x14x128xf32> to vector<12x12x128xf32>
    %c8_12 = arith.constant 8 : index
    %90 = memref.load %arg4[%c8_12] : memref<9xf32, #tpu.memory_space<smem>>
    %91 = vector.broadcast %90 : f32 to vector<12x12x128xf32>
    %92 = arith.mulf %89, %91 : vector<12x12x128xf32>
    %93 = arith.addf %88, %92 : vector<12x12x128xf32>
    %c0_13 = arith.constant 0 : index
    %94 = memref.load %arg5[%c0_13] : memref<1xf32, #tpu.memory_space<smem>>
    %95 = vector.broadcast %94 : f32 to vector<12x12x128xf32>
    %96 = arith.addf %93, %95 : vector<12x12x128xf32>
    %cst_14 = arith.constant 0.000000e+00 : f32
    %97 = vector.broadcast %cst_14 : f32 to vector<12x12x128xf32>
    %98 = arith.maximumf %96, %97 : vector<12x12x128xf32>
    %99 = vector.shape_cast %98 : vector<12x12x128xf32> to vector<6x2x12x128xf32>
    %100 = vector.extract_strided_slice %99 {offsets = [0, 0, 0, 0], sizes = [6, 1, 12, 128], strides = [1, 1, 1, 1]} : vector<6x2x12x128xf32> to vector<6x1x12x128xf32>
    %101 = vector.shape_cast %100 : vector<6x1x12x128xf32> to vector<6x12x128xf32>
    %102 = vector.extract_strided_slice %99 {offsets = [0, 1, 0, 0], sizes = [6, 1, 12, 128], strides = [1, 1, 1, 1]} : vector<6x2x12x128xf32> to vector<6x1x12x128xf32>
    %103 = vector.shape_cast %102 : vector<6x1x12x128xf32> to vector<6x12x128xf32>
    %104 = arith.maximumf %101, %103 : vector<6x12x128xf32>
    %c0_15 = arith.constant 0 : index
    %c0_16 = arith.constant 0 : index
    %c0_17 = arith.constant 0 : index
    %105 = vector.load %arg9[%c0_15, %c0_16, %c0_17] : memref<6x12x128xf32, #tpu.memory_space<vmem>>, vector<6x12x128xf32>
    tpu.vector_store %arg9[%c0_15, %c0_16, %c0_17], %104 {strides = array<i32>} : memref<6x12x128xf32, #tpu.memory_space<vmem>>, vector<6x12x128xf32>,
    %c0_18 = arith.constant 0 : index
    %c0_19 = arith.constant 0 : index
    %c0_20 = arith.constant 0 : index
    %106 = tpu.strided_load %arg9[%c0_18, %c0_19, %c0_20] {strides = array<i32: 1, 2, 1>} : memref<6x12x128xf32, #tpu.memory_space<vmem>>, vector<6x6x128xf32>
    %c0_21 = arith.constant 0 : index
    %c1_22 = arith.constant 1 : index
    %c0_23 = arith.constant 0 : index
    %107 = tpu.strided_load %arg9[%c0_21, %c1_22, %c0_23] {strides = array<i32: 1, 2, 1>} : memref<6x12x128xf32, #tpu.memory_space<vmem>>, vector<6x6x128xf32>
    %108 = arith.maximumf %106, %107 : vector<6x6x128xf32>
    %109 = vector.extract_strided_slice %108 {offsets = [0, 0, 0], sizes = [1, 6, 128], strides = [1, 1, 1]} : vector<6x6x128xf32> to vector<1x6x128xf32>
    %110 = vector.shape_cast %109 : vector<1x6x128xf32> to vector<6x128xf32>
    %c0_24 = arith.constant 0 : index
    %c0_25 = arith.constant 0 : index
    %111 = vector.load %arg10[%c0_24, %c0_25] : memref<36x128xf32, #tpu.memory_space<vmem>>, vector<6x128xf32>
    tpu.vector_store %arg10[%c0_24, %c0_25], %110 {strides = array<i32>} : memref<36x128xf32, #tpu.memory_space<vmem>>, vector<6x128xf32>,
    %112 = vector.extract_strided_slice %108 {offsets = [1, 0, 0], sizes = [1, 6, 128], strides = [1, 1, 1]} : vector<6x6x128xf32> to vector<1x6x128xf32>
    %113 = vector.shape_cast %112 : vector<1x6x128xf32> to vector<6x128xf32>
    %c6_26 = arith.constant 6 : index
    %c0_27 = arith.constant 0 : index
    %114 = vector.load %arg10[%c6_26, %c0_27] : memref<36x128xf32, #tpu.memory_space<vmem>>, vector<6x128xf32>
    tpu.vector_store %arg10[%c6_26, %c0_27], %113 {strides = array<i32>} : memref<36x128xf32, #tpu.memory_space<vmem>>, vector<6x128xf32>,
    %115 = vector.extract_strided_slice %108 {offsets = [2, 0, 0], sizes = [1, 6, 128], strides = [1, 1, 1]} : vector<6x6x128xf32> to vector<1x6x128xf32>
    %116 = vector.shape_cast %115 : vector<1x6x128xf32> to vector<6x128xf32>
    %c12 = arith.constant 12 : index
    %c0_28 = arith.constant 0 : index
    %117 = vector.load %arg10[%c12, %c0_28] : memref<36x128xf32, #tpu.memory_space<vmem>>, vector<6x128xf32>
    tpu.vector_store %arg10[%c12, %c0_28], %116 {strides = array<i32>} : memref<36x128xf32, #tpu.memory_space<vmem>>, vector<6x128xf32>,
    %118 = vector.extract_strided_slice %108 {offsets = [3, 0, 0], sizes = [1, 6, 128], strides = [1, 1, 1]} : vector<6x6x128xf32> to vector<1x6x128xf32>
    %119 = vector.shape_cast %118 : vector<1x6x128xf32> to vector<6x128xf32>
    %c18 = arith.constant 18 : index
    %c0_29 = arith.constant 0 : index
    %120 = vector.load %arg10[%c18, %c0_29] : memref<36x128xf32, #tpu.memory_space<vmem>>, vector<6x128xf32>
    tpu.vector_store %arg10[%c18, %c0_29], %119 {strides = array<i32>} : memref<36x128xf32, #tpu.memory_space<vmem>>, vector<6x128xf32>,
    %121 = vector.extract_strided_slice %108 {offsets = [4, 0, 0], sizes = [1, 6, 128], strides = [1, 1, 1]} : vector<6x6x128xf32> to vector<1x6x128xf32>
    %122 = vector.shape_cast %121 : vector<1x6x128xf32> to vector<6x128xf32>
    %c24 = arith.constant 24 : index
    %c0_30 = arith.constant 0 : index
    %123 = vector.load %arg10[%c24, %c0_30] : memref<36x128xf32, #tpu.memory_space<vmem>>, vector<6x128xf32>
    tpu.vector_store %arg10[%c24, %c0_30], %122 {strides = array<i32>} : memref<36x128xf32, #tpu.memory_space<vmem>>, vector<6x128xf32>,
    %124 = vector.extract_strided_slice %108 {offsets = [5, 0, 0], sizes = [1, 6, 128], strides = [1, 1, 1]} : vector<6x6x128xf32> to vector<1x6x128xf32>
    %125 = vector.shape_cast %124 : vector<1x6x128xf32> to vector<6x128xf32>
    %c30 = arith.constant 30 : index
    %c0_31 = arith.constant 0 : index
    %126 = vector.load %arg10[%c30, %c0_31] : memref<36x128xf32, #tpu.memory_space<vmem>>, vector<6x128xf32>
    tpu.vector_store %arg10[%c30, %c0_31], %125 {strides = array<i32>} : memref<36x128xf32, #tpu.memory_space<vmem>>, vector<6x128xf32>,
    %c0_32 = arith.constant 0 : index
    %c0_33 = arith.constant 0 : index
    %127 = vector.load %arg10[%c0_32, %c0_33] : memref<36x128xf32, #tpu.memory_space<vmem>>, vector<36x128xf32>
    %c0_34 = arith.constant 0 : index
    %c0_35 = arith.constant 0 : index
    %128 = vector.load %arg6[%c0_34, %c0_35] : memref<36x128xf32, #tpu.memory_space<vmem>>, vector<36x128xf32>
    %cst_36 = arith.constant dense<0.000000e+00> : vector<128x128xf32>
    %129 = tpu.matmul %127, %128, %cst_36 {dimension_numbers = #tpu.dot_dimension_numbers<[0], [0], [1], [1], [0, 1, 1, 1], [], []>} : vector<36x128xf32>, vector<36x128xf32>, vector<128x128xf32> -> vector<128x128xf32>
    %c0_37 = arith.constant 0 : index
    %c0_38 = arith.constant 0 : index
    %130 = vector.load %arg7[%c0_37, %c0_38] : memref<1x128xf32, #tpu.memory_space<vmem>>, vector<1x128xf32>
    %131 = vector.broadcast %130 : vector<1x128xf32> to vector<128x128xf32>
    %132 = arith.addf %129, %131 : vector<128x128xf32>
    %c0_39 = arith.constant 0 : index
    %c0_40 = arith.constant 0 : index
    %133 = vector.load %arg8[%c0_39, %c0_40] : memref<128x128xf32, #tpu.memory_space<vmem>>, vector<128x128xf32>
    tpu.vector_store %arg8[%c0_39, %c0_40], %132 {strides = array<i32>} : memref<128x128xf32, #tpu.memory_space<vmem>>, vector<128x128xf32>,
    return
  }
  func.func @transform_0(%arg0: i32) -> (i32, i32, i32) {
    %c0_i32 = arith.constant 0 : i32
    %c0_i32_0 = arith.constant 0 : i32
    %c0_i32_1 = arith.constant 0 : i32
    return %c0_i32, %c0_i32_0, %arg0 : i32, i32, i32
  }
  func.func @transform_1(%arg0: i32) -> i32 {
    %c0_i32 = arith.constant 0 : i32
    %c0_i32_0 = arith.constant 0 : i32
    return %c0_i32 : i32
  }
  func.func @transform_2(%arg0: i32) -> i32 {
    %c0_i32 = arith.constant 0 : i32
    %c0_i32_0 = arith.constant 0 : i32
    return %c0_i32 : i32
  }
  func.func @transform_3(%arg0: i32) -> i32 {
    %c0_i32 = arith.constant 0 : i32
    %c0_i32_0 = arith.constant 0 : i32
    return %c0_i32 : i32
  }
  func.func @transform_4(%arg0: i32) -> i32 {
    %c0_i32 = arith.constant 0 : i32
    %c0_i32_0 = arith.constant 0 : i32
    return %c0_i32 : i32
  }
  func.func @transform_5(%arg0: i32) -> (i32, i32) {
    %c0_i32 = arith.constant 0 : i32
    %c0_i32_0 = arith.constant 0 : i32
    %c0_i32_1 = arith.constant 0 : i32
    return %c0_i32, %c0_i32_0 : i32, i32
  }
  func.func @transform_6(%arg0: i32) -> (i32, i32) {
    %c0_i32 = arith.constant 0 : i32
    %c0_i32_0 = arith.constant 0 : i32
    %c0_i32_1 = arith.constant 0 : i32
    return %c0_i32, %c0_i32_0 : i32, i32
  }
  func.func @transform_7(%arg0: i32) -> (i32, i32) {
    %c0_i32 = arith.constant 0 : i32
    %c0_i32_0 = arith.constant 0 : i32
    return %arg0, %c0_i32 : i32, i32
  }
}

</mosaic_0001>

<llo_original>
// kernel: _embed_batch.1
$region0: #{_embed_batch.1}
  #allocation0 [shape = 'u32[]', space=smem, size = 0x4, offset = 0x4, fixed_abs, tag = 'smem constant byte address 0x4 - core index']
  #allocation1 [shape = 'u32[144,128]{1,0:T(1,128)}', space=vmem, size = 0x12000, scoped, tag = 'internal scratch']
  #allocation2 [shape = 'f32[6,12,128]{2,1,0:T(8,128)}', space=vmem, size = 0xc000, scoped, tag = 'scratch operand']
  #allocation3 [shape = 'f32[36,128]{1,0:T(8,128)}', space=vmem, size = 0x5000, scoped, tag = 'scratch operand']
  #allocation4 [shape = 'f32[1]{0:T(128)S(6)}', space=smem, size = 0x200, scoped, tag = 'scoped memory for _embed_batch.1']
  #allocation5 [shape = 'f32[1]{0:T(128)S(6)}', space=smem, size = 0x200, scoped, tag = 'scoped memory for _embed_batch.1']
  %s0 = inlined_call_operand.vmem [shape: f32[16,16,128], index: 0, kind: input, shape index: {}]
  %s1 = inlined_call_operand.vmem [shape: f32[9], index: 1, kind: input, shape index: {}]
  %s2 = inlined_call_operand.<no memory space> [shape: f32[1], index: 2, kind: input, shape index: {}]
  %s3 = inlined_call_operand.vmem [shape: f32[9], index: 3, kind: input, shape index: {}]
  %s4 = inlined_call_operand.<no memory space> [shape: f32[1], index: 4, kind: input, shape index: {}]
  %s5 = inlined_call_operand.vmem [shape: f32[36,128], index: 5, kind: input, shape index: {}]
  %s6 = inlined_call_operand.vmem [shape: f32[1,128], index: 6, kind: input, shape index: {}]
  %s7 = inlined_call_operand.vmem [shape: f32[128,128], index: 7, kind: output, shape index: {}]
  %s8 = sld [smem:[#allocation0]]
  $region46: #{_embed_batch.1} parent=0
    _
  %s10 = ssub.s32 1, %s8
  %s11 = scalar_select 0, %s10, %s8
  %12 = sst [smem:[#allocation4]] %s2
  %13 = sst [smem:[#allocation5]] %s4
  $region1: #{_embed_batch.1} parent=0
    #allocation6 [shape = 'u8[512]{0}', space=smem, size = 0x200, scoped, tag = 'input window, operand 1, single buffered']
    #allocation7 [shape = 's32[1]{0}', space=sflag, size = 0x4, scoped, tag = 'scoped memory for _embed_batch.1']
    #allocation8 [shape = 'u8[512]{0}', space=smem, size = 0x200, scoped, tag = 'input window, operand 3, single buffered']
    #allocation9 [shape = 's32[1]{0}', space=sflag, size = 0x4, scoped, tag = 'scoped memory for _embed_batch.1']
    %14 = vsyncpa [#allocation7], 0
    %15 = vsyncpa [#allocation9], 0
    // Predicated region
    $region2: #{_embed_batch.1} parent=1 // pred_check
      _
    $region3: #{_embed_batch.1} parent=1 // pred_check_branch
      %17 = sbr.rel (0) target = $region5
    $region4: #{_embed_batch.1} parent=1 // pred_region
      _
    $region5: #{_embed_batch.1} parent=1 // pred_fallthru
      _
    // Predicated region
    $region6: #{_embed_batch.1} parent=1 // pred_check
      _
    $region7: #{_embed_batch.1} parent=1 // pred_check_branch
      %19 = sbr.rel (0) target = $region9
    $region8: #{_embed_batch.1} parent=1 // pred_region
      %s21 = ssub.s32 16, 16
      %22 = vsyncadd [#allocation7], %s21
      %s24 = sshll.u32 %s1, 4
      %s25 = int_to_ptr.vmem [resolvable:$true] %s24
      %27 = dma.vmem_to_smem %s25, 16, [#allocation6], [#allocation7]
    $region9: #{_embed_batch.1} parent=1 // pred_fallthru
      _
    // Predicated region
    $region10: #{_embed_batch.1} parent=1 // pred_check
      _
    $region11: #{_embed_batch.1} parent=1 // pred_check_branch
      %29 = sbr.rel (0) target = $region13
    $region12: #{_embed_batch.1} parent=1 // pred_region
      _
    $region13: #{_embed_batch.1} parent=1 // pred_fallthru
      _
    // Predicated region
    $region14: #{_embed_batch.1} parent=1 // pred_check
      _
    $region15: #{_embed_batch.1} parent=1 // pred_check_branch
      %31 = sbr.rel (0) target = $region17
    $region16: #{_embed_batch.1} parent=1 // pred_region
      %s33 = ssub.s32 16, 16
      %34 = vsyncadd [#allocation9], %s33
      %s36 = sshll.u32 %s3, 4
      %s37 = int_to_ptr.vmem [resolvable:$true] %s36
      %39 = dma.vmem_to_smem %s37, 16, [#allocation8], [#allocation9]
    $region17: #{_embed_batch.1} parent=1 // pred_fallthru
      _
    // Predicated region
    $region18: #{_embed_batch.1} parent=1 // pred_check
      _
    $region19: #{_embed_batch.1} parent=1 // pred_check_branch
      %41 = sbr.rel (0) target = $region21
    $region20: #{_embed_batch.1} parent=1 // pred_region
      _
    $region21: #{_embed_batch.1} parent=1 // pred_fallthru
      _
    // Predicated region
    $region22: #{_embed_batch.1} parent=1 // pred_check
      _
    $region23: #{_embed_batch.1} parent=1 // pred_check_branch
      %43 = sbr.rel (0) target = $region25
    $region24: #{_embed_batch.1} parent=1 // pred_region
      _
    $region25: #{_embed_batch.1} parent=1 // pred_fallthru
      _
    // Predicated region
    $region26: #{_embed_batch.1} parent=1 // pred_check
      _
    $region27: #{_embed_batch.1} parent=1 // pred_check_branch
      %45 = sbr.rel (0) target = $region29
    $region28: #{_embed_batch.1} parent=1 // pred_region
      _
    $region29: #{_embed_batch.1} parent=1 // pred_fallthru
      _
    // Predicated region
    $region30: #{_embed_batch.1} parent=1 // pred_check
      _
    $region31: #{_embed_batch.1} parent=1 // pred_check_branch
      %47 = sbr.rel (0) target = $region33
    $region32: #{_embed_batch.1} parent=1 // pred_region
      %48 = dma.done [#allocation7], 16
    $region33: #{_embed_batch.1} parent=1 // pred_fallthru
      _
    // Predicated region
    $region34: #{_embed_batch.1} parent=1 // pred_check
      _
    $region35: #{_embed_batch.1} parent=1 // pred_check_branch
      %50 = sbr.rel (0) target = $region37
    $region36: #{_embed_batch.1} parent=1 // pred_region
      %51 = dma.done [#allocation9], 16
    $region37: #{_embed_batch.1} parent=1 // pred_fallthru
      _
    %52 = sfence
    %v53 = vld [vmem:[%s0] sm:$0xff]
    %v54 = vld [vmem:[%s0 + $0x8] sm:$0xff]
    %v55 = vld [vmem:[%s0 + $0x10] sm:$0xff]
    %v56 = vld [vmem:[%s0 + $0x18] sm:$0xff]
    %v57 = vld [vmem:[%s0 + $0x20] sm:$0xff]
    %v58 = vld [vmem:[%s0 + $0x28] sm:$0xff]
    %v59 = vld [vmem:[%s0 + $0x30] sm:$0xff]
    %v60 = vld [vmem:[%s0 + $0x38] sm:$0xff]
    %v61 = vld [vmem:[%s0 + $0x40] sm:$0xff]
    %v62 = vld [vmem:[%s0 + $0x48] sm:$0xff]
    %v63 = vld [vmem:[%s0 + $0x50] sm:$0xff]
    %v64 = vld [vmem:[%s0 + $0x58] sm:$0xff]
    %v65 = vld [vmem:[%s0 + $0x60] sm:$0xff]
    %v66 = vld [vmem:[%s0 + $0x68] sm:$0xff]
    %v67 = vld [vmem:[%s0 + $0x70] sm:$0xff]
    %v68 = vld [vmem:[%s0 + $0x78] sm:$0xff]
    %v69 = vld [vmem:[%s0 + $0x80] sm:$0xff]
    %v70 = vld [vmem:[%s0 + $0x88] sm:$0xff]
    %v71 = vld [vmem:[%s0 + $0x90] sm:$0xff]
    %v72 = vld [vmem:[%s0 + $0x98] sm:$0xff]
    %v73 = vld [vmem:[%s0 + $0xa0] sm:$0xff]
    %v74 = vld [vmem:[%s0 + $0xa8] sm:$0xff]
    %v75 = vld [vmem:[%s0 + $0xb0] sm:$0xff]
    %v76 = vld [vmem:[%s0 + $0xb8] sm:$0xff]
    %v77 = vld [vmem:[%s0 + $0xc0] sm:$0xff]
    %v78 = vld [vmem:[%s0 + $0xc8] sm:$0xff]
    %v79 = vld [vmem:[%s0 + $0xd0] sm:$0xff]
    %v80 = vld [vmem:[%s0 + $0xd8] sm:$0xff]
    %v81 = vld [vmem:[%s0 + $0xe0] sm:$0xff]
    %v82 = vld [vmem:[%s0 + $0xe8] sm:$0xff]
    %v83 = vld [vmem:[%s0 + $0xf0] sm:$0xff]
    %v84 = vld [vmem:[%s0 + $0xf8] sm:$0xff]
    %s85 = sld [smem:[#allocation6]]
    %v86 = vstv %s85
    %v87 = vmul.f32 %v53, %v86
    %v88 = vmul.f32 %v54, %v86
    %v89 = vmul.f32 %v55, %v86
    %v90 = vmul.f32 %v56, %v86
    %v91 = vmul.f32 %v57, %v86
    %v92 = vmul.f32 %v58, %v86
    %v93 = vmul.f32 %v59, %v86
    %v94 = vmul.f32 %v60, %v86
    %v95 = vmul.f32 %v61, %v86
    %v96 = vmul.f32 %v62, %v86
    %v97 = vmul.f32 %v63, %v86
    %v98 = vmul.f32 %v64, %v86
    %v99 = vmul.f32 %v65, %v86
    %v100 = vmul.f32 %v66, %v86
    %v101 = vmul.f32 %v67, %v86
    %v102 = vmul.f32 %v68, %v86
    %v103 = vmul.f32 %v69, %v86
    %v104 = vmul.f32 %v70, %v86
    %v105 = vmul.f32 %v71, %v86
    %v106 = vmul.f32 %v72, %v86
    %v107 = vmul.f32 %v73, %v86
    %v108 = vmul.f32 %v74, %v86
    %v109 = vmul.f32 %v75, %v86
    %v110 = vmul.f32 %v76, %v86
    %v111 = vmul.f32 %v77, %v86
    %v112 = vmul.f32 %v78, %v86
    %v113 = vmul.f32 %v79, %v86
    %v114 = vmul.f32 %v80, %v86
    %s115 = sld [smem:[#allocation6 + $0x1]]
    %v116 = vstv %s115
    %v117 = vmul.f32 %v53, %v116
    %v118 = vmul.f32 %v54, %v116
    %v119 = vmul.f32 %v55, %v116
    %v120 = vmul.f32 %v56, %v116
    %v121 = vmul.f32 %v57, %v116
    %v122 = vmul.f32 %v58, %v116
    %v123 = vmul.f32 %v59, %v116
    %v124 = vmul.f32 %v60, %v116
    %v125 = vmul.f32 %v61, %v116
    %v126 = vmul.f32 %v62, %v116
    %v127 = vmul.f32 %v63, %v116
    %v128 = vmul.f32 %v64, %v116
    %v129 = vmul.f32 %v65, %v116
    %v130 = vmul.f32 %v66, %v116
    %v131 = vmul.f32 %v67, %v116
    %v132 = vmul.f32 %v68, %v116
    %v133 = vmul.f32 %v69, %v116
    %v134 = vmul.f32 %v70, %v116
    %v135 = vmul.f32 %v71, %v116
    %v136 = vmul.f32 %v72, %v116
    %v137 = vmul.f32 %v73, %v116
    %v138 = vmul.f32 %v74, %v116
    %v139 = vmul.f32 %v75, %v116
    %v140 = vmul.f32 %v76, %v116
    %v141 = vmul.f32 %v77, %v116
    %v142 = vmul.f32 %v78, %v116
    %v143 = vmul.f32 %v79, %v116
    %v144 = vmul.f32 %v80, %v116
    %vm173 = vcmask 1046528
    %v174 = vrot.slane %v117, 1
    %v175 = vrot.slane %v118, 1
    %v176 = vsel %vm173, %v174, %v175
    %v177 = vrot.slane %v119, 1
    %v178 = vrot.slane %v120, 1
    %v179 = vsel %vm173, %v177, %v178
    %v180 = vrot.slane %v121, 1
    %v181 = vrot.slane %v122, 1
    %v182 = vsel %vm173, %v180, %v181
    %v183 = vrot.slane %v123, 1
    %v184 = vrot.slane %v124, 1
    %v185 = vsel %vm173, %v183, %v184
    %v186 = vrot.slane %v125, 1
    %v187 = vrot.slane %v126, 1
    %v188 = vsel %vm173, %v186, %v187
    %v189 = vrot.slane %v127, 1
    %v190 = vrot.slane %v128, 1
    %v191 = vsel %vm173, %v189, %v190
    %v192 = vrot.slane %v129, 1
    %v193 = vrot.slane %v130, 1
    %v194 = vsel %vm173, %v192, %v193
    %v195 = vrot.slane %v131, 1
    %v196 = vrot.slane %v132, 1
    %v197 = vsel %vm173, %v195, %v196
    %v198 = vrot.slane %v133, 1
    %v199 = vrot.slane %v134, 1
    %v200 = vsel %vm173, %v198, %v199
    %v201 = vrot.slane %v135, 1
    %v202 = vrot.slane %v136, 1
    %v203 = vsel %vm173, %v201, %v202
    %v204 = vrot.slane %v137, 1
    %v205 = vrot.slane %v138, 1
    %v206 = vsel %vm173, %v204, %v205
    %v207 = vrot.slane %v139, 1
    %v208 = vrot.slane %v140, 1
    %v209 = vsel %vm173, %v207, %v208
    %v210 = vrot.slane %v141, 1
    %v211 = vrot.slane %v142, 1
    %v212 = vsel %vm173, %v210, %v211
    %v213 = vrot.slane %v143, 1
    %v214 = vrot.slane %v144, 1
    %v215 = vsel %vm173, %v213, %v214
    %v244 = vadd.f32 %v87, %v176
    %v245 = vadd.f32 %v88, %v175
    %v246 = vadd.f32 %v89, %v179
    %v247 = vadd.f32 %v90, %v178
    %v248 = vadd.f32 %v91, %v182
    %v249 = vadd.f32 %v92, %v181
    %v250 = vadd.f32 %v93, %v185
    %v251 = vadd.f32 %v94, %v184
    %v252 = vadd.f32 %v95, %v188
    %v253 = vadd.f32 %v96, %v187
    %v254 = vadd.f32 %v97, %v191
    %v255 = vadd.f32 %v98, %v190
    %v256 = vadd.f32 %v99, %v194
    %v257 = vadd.f32 %v100, %v193
    %v258 = vadd.f32 %v101, %v197
    %v259 = vadd.f32 %v102, %v196
    %v260 = vadd.f32 %v103, %v200
    %v261 = vadd.f32 %v104, %v199
    %v262 = vadd.f32 %v105, %v203
    %v263 = vadd.f32 %v106, %v202
    %v264 = vadd.f32 %v107, %v206
    %v265 = vadd.f32 %v108, %v205
    %v266 = vadd.f32 %v109, %v209
    %v267 = vadd.f32 %v110, %v208
    %v268 = vadd.f32 %v111, %v212
    %v269 = vadd.f32 %v112, %v211
    %v270 = vadd.f32 %v113, %v215
    %v271 = vadd.f32 %v114, %v214
    %s272 = sld [smem:[#allocation6 + $0x2]]
    %v273 = vstv %s272
    %v274 = vmul.f32 %v53, %v273
    %v275 = vmul.f32 %v54, %v273
    %v276 = vmul.f32 %v55, %v273
    %v277 = vmul.f32 %v56, %v273
    %v278 = vmul.f32 %v57, %v273
    %v279 = vmul.f32 %v58, %v273
    %v280 = vmul.f32 %v59, %v273
    %v281 = vmul.f32 %v60, %v273
    %v282 = vmul.f32 %v61, %v273
    %v283 = vmul.f32 %v62, %v273
    %v284 = vmul.f32 %v63, %v273
    %v285 = vmul.f32 %v64, %v273
    %v286 = vmul.f32 %v65, %v273
    %v287 = vmul.f32 %v66, %v273
    %v288 = vmul.f32 %v67, %v273
    %v289 = vmul.f32 %v68, %v273
    %v290 = vmul.f32 %v69, %v273
    %v291 = vmul.f32 %v70, %v273
    %v292 = vmul.f32 %v71, %v273
    %v293 = vmul.f32 %v72, %v273
    %v294 = vmul.f32 %v73, %v273
    %v295 = vmul.f32 %v74, %v273
    %v296 = vmul.f32 %v75, %v273
    %v297 = vmul.f32 %v76, %v273
    %v298 = vmul.f32 %v77, %v273
    %v299 = vmul.f32 %v78, %v273
    %v300 = vmul.f32 %v79, %v273
    %v301 = vmul.f32 %v80, %v273
    %vm330 = vcmask 1045504
    %v331 = vrot.slane %v274, 2
    %v332 = vrot.slane %v275, 2
    %v333 = vsel %vm330, %v331, %v332
    %v334 = vrot.slane %v276, 2
    %v335 = vrot.slane %v277, 2
    %v336 = vsel %vm330, %v334, %v335
    %v337 = vrot.slane %v278, 2
    %v338 = vrot.slane %v279, 2
    %v339 = vsel %vm330, %v337, %v338
    %v340 = vrot.slane %v280, 2
    %v341 = vrot.slane %v281, 2
    %v342 = vsel %vm330, %v340, %v341
    %v343 = vrot.slane %v282, 2
    %v344 = vrot.slane %v283, 2
    %v345 = vsel %vm330, %v343, %v344
    %v346 = vrot.slane %v284, 2
    %v347 = vrot.slane %v285, 2
    %v348 = vsel %vm330, %v346, %v347
    %v349 = vrot.slane %v286, 2
    %v350 = vrot.slane %v287, 2
    %v351 = vsel %vm330, %v349, %v350
    %v352 = vrot.slane %v288, 2
    %v353 = vrot.slane %v289, 2
    %v354 = vsel %vm330, %v352, %v353
    %v355 = vrot.slane %v290, 2
    %v356 = vrot.slane %v291, 2
    %v357 = vsel %vm330, %v355, %v356
    %v358 = vrot.slane %v292, 2
    %v359 = vrot.slane %v293, 2
    %v360 = vsel %vm330, %v358, %v359
    %v361 = vrot.slane %v294, 2
    %v362 = vrot.slane %v295, 2
    %v363 = vsel %vm330, %v361, %v362
    %v364 = vrot.slane %v296, 2
    %v365 = vrot.slane %v297, 2
    %v366 = vsel %vm330, %v364, %v365
    %v367 = vrot.slane %v298, 2
    %v368 = vrot.slane %v299, 2
    %v369 = vsel %vm330, %v367, %v368
    %v370 = vrot.slane %v300, 2
    %v371 = vrot.slane %v301, 2
    %v372 = vsel %vm330, %v370, %v371
    %v401 = vadd.f32 %v244, %v333
    %v402 = vadd.f32 %v245, %v332
    %v403 = vadd.f32 %v246, %v336
    %v404 = vadd.f32 %v247, %v335
    %v405 = vadd.f32 %v248, %v339
    %v406 = vadd.f32 %v249, %v338
    %v407 = vadd.f32 %v250, %v342
    %v408 = vadd.f32 %v251, %v341
    %v409 = vadd.f32 %v252, %v345
    %v410 = vadd.f32 %v253, %v344
    %v411 = vadd.f32 %v254, %v348
    %v412 = vadd.f32 %v255, %v347
    %v413 = vadd.f32 %v256, %v351
    %v414 = vadd.f32 %v257, %v350
    %v415 = vadd.f32 %v258, %v354
    %v416 = vadd.f32 %v259, %v353
    %v417 = vadd.f32 %v260, %v357
    %v418 = vadd.f32 %v261, %v356
    %v419 = vadd.f32 %v262, %v360
    %v420 = vadd.f32 %v263, %v359
    %v421 = vadd.f32 %v264, %v363
    %v422 = vadd.f32 %v265, %v362
    %v423 = vadd.f32 %v266, %v366
    %v424 = vadd.f32 %v267, %v365
    %v425 = vadd.f32 %v268, %v369
    %v426 = vadd.f32 %v269, %v368
    %v427 = vadd.f32 %v270, %v372
    %v428 = vadd.f32 %v271, %v371
    %s429 = sld [smem:[#allocation6 + $0x3]]
    %v430 = vstv %s429
    %v431 = vmul.f32 %v55, %v430
    %v432 = vmul.f32 %v56, %v430
    %v433 = vmul.f32 %v57, %v430
    %v434 = vmul.f32 %v58, %v430
    %v435 = vmul.f32 %v59, %v430
    %v436 = vmul.f32 %v60, %v430
    %v437 = vmul.f32 %v61, %v430
    %v438 = vmul.f32 %v62, %v430
    %v439 = vmul.f32 %v63, %v430
    %v440 = vmul.f32 %v64, %v430
    %v441 = vmul.f32 %v65, %v430
    %v442 = vmul.f32 %v66, %v430
    %v443 = vmul.f32 %v67, %v430
    %v444 = vmul.f32 %v68, %v430
    %v445 = vmul.f32 %v69, %v430
    %v446 = vmul.f32 %v70, %v430
    %v447 = vmul.f32 %v71, %v430
    %v448 = vmul.f32 %v72, %v430
    %v449 = vmul.f32 %v73, %v430
    %v450 = vmul.f32 %v74, %v430
    %v451 = vmul.f32 %v75, %v430
    %v452 = vmul.f32 %v76, %v430
    %v453 = vmul.f32 %v77, %v430
    %v454 = vmul.f32 %v78, %v430
    %v455 = vmul.f32 %v79, %v430
    %v456 = vmul.f32 %v80, %v430
    %v457 = vmul.f32 %v81, %v430
    %v458 = vmul.f32 %v82, %v430
    %v459 = vadd.f32 %v401, %v431
    %v460 = vadd.f32 %v402, %v432
    %v461 = vadd.f32 %v403, %v433
    %v462 = vadd.f32 %v404, %v434
    %v463 = vadd.f32 %v405, %v435
    %v464 = vadd.f32 %v406, %v436
    %v465 = vadd.f32 %v407, %v437
    %v466 = vadd.f32 %v408, %v438
    %v467 = vadd.f32 %v409, %v439
    %v468 = vadd.f32 %v410, %v440
    %v469 = vadd.f32 %v411, %v441
    %v470 = vadd.f32 %v412, %v442
    %v471 = vadd.f32 %v413, %v443
    %v472 = vadd.f32 %v414, %v444
    %v473 = vadd.f32 %v415, %v445
    %v474 = vadd.f32 %v416, %v446
    %v475 = vadd.f32 %v417, %v447
    %v476 = vadd.f32 %v418, %v448
    %v477 = vadd.f32 %v419, %v449
    %v478 = vadd.f32 %v420, %v450
    %v479 = vadd.f32 %v421, %v451
    %v480 = vadd.f32 %v422, %v452
    %v481 = vadd.f32 %v423, %v453
    %v482 = vadd.f32 %v424, %v454
    %v483 = vadd.f32 %v425, %v455
    %v484 = vadd.f32 %v426, %v456
    %v485 = vadd.f32 %v427, %v457
    %v486 = vadd.f32 %v428, %v458
    %s487 = sld [smem:[#allocation6 + $0x4]]
    %v488 = vstv %s487
    %v489 = vmul.f32 %v55, %v488
    %v490 = vmul.f32 %v56, %v488
    %v491 = vmul.f32 %v57, %v488
    %v492 = vmul.f32 %v58, %v488
    %v493 = vmul.f32 %v59, %v488
    %v494 = vmul.f32 %v60, %v488
    %v495 = vmul.f32 %v61, %v488
    %v496 = vmul.f32 %v62, %v488
    %v497 = vmul.f32 %v63, %v488
    %v498 = vmul.f32 %v64, %v488
    %v499 = vmul.f32 %v65, %v488
    %v500 = vmul.f32 %v66, %v488
    %v501 = vmul.f32 %v67, %v488
    %v502 = vmul.f32 %v68, %v488
    %v503 = vmul.f32 %v69, %v488
    %v504 = vmul.f32 %v70, %v488
    %v505 = vmul.f32 %v71, %v488
    %v506 = vmul.f32 %v72, %v488
    %v507 = vmul.f32 %v73, %v488
    %v508 = vmul.f32 %v74, %v488
    %v509 = vmul.f32 %v75, %v488
    %v510 = vmul.f32 %v76, %v488
    %v511 = vmul.f32 %v77, %v488
    %v512 = vmul.f32 %v78, %v488
    %v513 = vmul.f32 %v79, %v488
    %v514 = vmul.f32 %v80, %v488
    %v515 = vmul.f32 %v81, %v488
    %v516 = vmul.f32 %v82, %v488
    %v545 = vrot.slane %v489, 1
    %v546 = vrot.slane %v490, 1
    %v547 = vsel %vm173, %v545, %v546
    %v548 = vrot.slane %v491, 1
    %v549 = vrot.slane %v492, 1
    %v550 = vsel %vm173, %v548, %v549
    %v551 = vrot.slane %v493, 1
    %v552 = vrot.slane %v494, 1
    %v553 = vsel %vm173, %v551, %v552
    %v554 = vrot.slane %v495, 1
    %v555 = vrot.slane %v496, 1
    %v556 = vsel %vm173, %v554, %v555
    %v557 = vrot.slane %v497, 1
    %v558 = vrot.slane %v498, 1
    %v559 = vsel %vm173, %v557, %v558
    %v560 = vrot.slane %v499, 1
    %v561 = vrot.slane %v500, 1
    %v562 = vsel %vm173, %v560, %v561
    %v563 = vrot.slane %v501, 1
    %v564 = vrot.slane %v502, 1
    %v565 = vsel %vm173, %v563, %v564
    %v566 = vrot.slane %v503, 1
    %v567 = vrot.slane %v504, 1
    %v568 = vsel %vm173, %v566, %v567
    %v569 = vrot.slane %v505, 1
    %v570 = vrot.slane %v506, 1
    %v571 = vsel %vm173, %v569, %v570
    %v572 = vrot.slane %v507, 1
    %v573 = vrot.slane %v508, 1
    %v574 = vsel %vm173, %v572, %v573
    %v575 = vrot.slane %v509, 1
    %v576 = vrot.slane %v510, 1
    %v577 = vsel %vm173, %v575, %v576
    %v578 = vrot.slane %v511, 1
    %v579 = vrot.slane %v512, 1
    %v580 = vsel %vm173, %v578, %v579
    %v581 = vrot.slane %v513, 1
    %v582 = vrot.slane %v514, 1
    %v583 = vsel %vm173, %v581, %v582
    %v584 = vrot.slane %v515, 1
    %v585 = vrot.slane %v516, 1
    %v586 = vsel %vm173, %v584, %v585
    %v615 = vadd.f32 %v459, %v547
    %v616 = vadd.f32 %v460, %v546
    %v617 = vadd.f32 %v461, %v550
    %v618 = vadd.f32 %v462, %v549
    %v619 = vadd.f32 %v463, %v553
    %v620 = vadd.f32 %v464, %v552
    %v621 = vadd.f32 %v465, %v556
    %v622 = vadd.f32 %v466, %v555
    %v623 = vadd.f32 %v467, %v559
    %v624 = vadd.f32 %v468, %v558
    %v625 = vadd.f32 %v469, %v562
    %v626 = vadd.f32 %v470, %v561
    %v627 = vadd.f32 %v471, %v565
    %v628 = vadd.f32 %v472, %v564
    %v629 = vadd.f32 %v473, %v568
    %v630 = vadd.f32 %v474, %v567
    %v631 = vadd.f32 %v475, %v571
    %v632 = vadd.f32 %v476, %v570
    %v633 = vadd.f32 %v477, %v574
    %v634 = vadd.f32 %v478, %v573
    %v635 = vadd.f32 %v479, %v577
    %v636 = vadd.f32 %v480, %v576
    %v637 = vadd.f32 %v481, %v580
    %v638 = vadd.f32 %v482, %v579
    %v639 = vadd.f32 %v483, %v583
    %v640 = vadd.f32 %v484, %v582
    %v641 = vadd.f32 %v485, %v586
    %v642 = vadd.f32 %v486, %v585
    %s643 = sld [smem:[#allocation6 + $0x5]]
    %v644 = vstv %s643
    %v645 = vmul.f32 %v55, %v644
    %v646 = vmul.f32 %v56, %v644
    %v647 = vmul.f32 %v57, %v644
    %v648 = vmul.f32 %v58, %v644
    %v649 = vmul.f32 %v59, %v644
    %v650 = vmul.f32 %v60, %v644
    %v651 = vmul.f32 %v61, %v644
    %v652 = vmul.f32 %v62, %v644
    %v653 = vmul.f32 %v63, %v644
    %v654 = vmul.f32 %v64, %v644
    %v655 = vmul.f32 %v65, %v644
    %v656 = vmul.f32 %v66, %v644
    %v657 = vmul.f32 %v67, %v644
    %v658 = vmul.f32 %v68, %v644
    %v659 = vmul.f32 %v69, %v644
    %v660 = vmul.f32 %v70, %v644
    %v661 = vmul.f32 %v71, %v644
    %v662 = vmul.f32 %v72, %v644
    %v663 = vmul.f32 %v73, %v644
    %v664 = vmul.f32 %v74, %v644
    %v665 = vmul.f32 %v75, %v644
    %v666 = vmul.f32 %v76, %v644
    %v667 = vmul.f32 %v77, %v644
    %v668 = vmul.f32 %v78, %v644
    %v669 = vmul.f32 %v79, %v644
    %v670 = vmul.f32 %v80, %v644
    %v671 = vmul.f32 %v81, %v644
    %v672 = vmul.f32 %v82, %v644
    %v701 = vrot.slane %v645, 2
    %v702 = vrot.slane %v646, 2
    %v703 = vsel %vm330, %v701, %v702
    %v704 = vrot.slane %v647, 2
    %v705 = vrot.slane %v648, 2
    %v706 = vsel %vm330, %v704, %v705
    %v707 = vrot.slane %v649, 2
    %v708 = vrot.slane %v650, 2
    %v709 = vsel %vm330, %v707, %v708
    %v710 = vrot.slane %v651, 2
    %v711 = vrot.slane %v652, 2
    %v712 = vsel %vm330, %v710, %v711
    %v713 = vrot.slane %v653, 2
    %v714 = vrot.slane %v654, 2
    %v715 = vsel %vm330, %v713, %v714
    %v716 = vrot.slane %v655, 2
    %v717 = vrot.slane %v656, 2
    %v718 = vsel %vm330, %v716, %v717
    %v719 = vrot.slane %v657, 2
    %v720 = vrot.slane %v658, 2
    %v721 = vsel %vm330, %v719, %v720
    %v722 = vrot.slane %v659, 2
    %v723 = vrot.slane %v660, 2
    %v724 = vsel %vm330, %v722, %v723
    %v725 = vrot.slane %v661, 2
    %v726 = vrot.slane %v662, 2
    %v727 = vsel %vm330, %v725, %v726
    %v728 = vrot.slane %v663, 2
    %v729 = vrot.slane %v664, 2
    %v730 = vsel %vm330, %v728, %v729
    %v731 = vrot.slane %v665, 2
    %v732 = vrot.slane %v666, 2
    %v733 = vsel %vm330, %v731, %v732
    %v734 = vrot.slane %v667, 2
    %v735 = vrot.slane %v668, 2
    %v736 = vsel %vm330, %v734, %v735
    %v737 = vrot.slane %v669, 2
    %v738 = vrot.slane %v670, 2
    %v739 = vsel %vm330, %v737, %v738
    %v740 = vrot.slane %v671, 2
    %v741 = vrot.slane %v672, 2
    %v742 = vsel %vm330, %v740, %v741
    %v771 = vadd.f32 %v615, %v703
    %v772 = vadd.f32 %v616, %v702
    %v773 = vadd.f32 %v617, %v706
    %v774 = vadd.f32 %v618, %v705
    %v775 = vadd.f32 %v619, %v709
    %v776 = vadd.f32 %v620, %v708
    %v777 = vadd.f32 %v621, %v712
    %v778 = vadd.f32 %v622, %v711
    %v779 = vadd.f32 %v623, %v715
    %v780 = vadd.f32 %v624, %v714
    %v781 = vadd.f32 %v625, %v718
    %v782 = vadd.f32 %v626, %v717
    %v783 = vadd.f32 %v627, %v721
    %v784 = vadd.f32 %v628, %v720
    %v785 = vadd.f32 %v629, %v724
    %v786 = vadd.f32 %v630, %v723
    %v787 = vadd.f32 %v631, %v727
    %v788 = vadd.f32 %v632, %v726
    %v789 = vadd.f32 %v633, %v730
    %v790 = vadd.f32 %v634, %v729
    %v791 = vadd.f32 %v635, %v733
    %v792 = vadd.f32 %v636, %v732
    %v793 = vadd.f32 %v637, %v736
    %v794 = vadd.f32 %v638, %v735
    %v795 = vadd.f32 %v639, %v739
    %v796 = vadd.f32 %v640, %v738
    %v797 = vadd.f32 %v641, %v742
    %v798 = vadd.f32 %v642, %v741
    %s799 = sld [smem:[#allocation6 + $0x6]]
    %v800 = vstv %s799
    %v801 = vmul.f32 %v57, %v800
    %v802 = vmul.f32 %v58, %v800
    %v803 = vmul.f32 %v59, %v800
    %v804 = vmul.f32 %v60, %v800
    %v805 = vmul.f32 %v61, %v800
    %v806 = vmul.f32 %v62, %v800
    %v807 = vmul.f32 %v63, %v800
    %v808 = vmul.f32 %v64, %v800
    %v809 = vmul.f32 %v65, %v800
    %v810 = vmul.f32 %v66, %v800
    %v811 = vmul.f32 %v67, %v800
    %v812 = vmul.f32 %v68, %v800
    %v813 = vmul.f32 %v69, %v800
    %v814 = vmul.f32 %v70, %v800
    %v815 = vmul.f32 %v71, %v800
    %v816 = vmul.f32 %v72, %v800
    %v817 = vmul.f32 %v73, %v800
    %v818 = vmul.f32 %v74, %v800
    %v819 = vmul.f32 %v75, %v800
    %v820 = vmul.f32 %v76, %v800
    %v821 = vmul.f32 %v77, %v800
    %v822 = vmul.f32 %v78, %v800
    %v823 = vmul.f32 %v79, %v800
    %v824 = vmul.f32 %v80, %v800
    %v825 = vmul.f32 %v81, %v800
    %v826 = vmul.f32 %v82, %v800
    %v827 = vmul.f32 %v83, %v800
    %v828 = vmul.f32 %v84, %v800
    %v829 = vadd.f32 %v771, %v801
    %v830 = vadd.f32 %v772, %v802
    %v831 = vadd.f32 %v773, %v803
    %v832 = vadd.f32 %v774, %v804
    %v833 = vadd.f32 %v775, %v805
    %v834 = vadd.f32 %v776, %v806
    %v835 = vadd.f32 %v777, %v807
    %v836 = vadd.f32 %v778, %v808
    %v837 = vadd.f32 %v779, %v809
    %v838 = vadd.f32 %v780, %v810
    %v839 = vadd.f32 %v781, %v811
    %v840 = vadd.f32 %v782, %v812
    %v841 = vadd.f32 %v783, %v813
    %v842 = vadd.f32 %v784, %v814
    %v843 = vadd.f32 %v785, %v815
    %v844 = vadd.f32 %v786, %v816
    %v845 = vadd.f32 %v787, %v817
    %v846 = vadd.f32 %v788, %v818
    %v847 = vadd.f32 %v789, %v819
    %v848 = vadd.f32 %v790, %v820
    %v849 = vadd.f32 %v791, %v821
    %v850 = vadd.f32 %v792, %v822
    %v851 = vadd.f32 %v793, %v823
    %v852 = vadd.f32 %v794, %v824
    %v853 = vadd.f32 %v795, %v825
    %v854 = vadd.f32 %v796, %v826
    %v855 = vadd.f32 %v797, %v827
    %v856 = vadd.f32 %v798, %v828
    %s857 = sld [smem:[#allocation6 + $0x7]]
    %v858 = vstv %s857
    %v859 = vmul.f32 %v57, %v858
    %v860 = vmul.f32 %v58, %v858
    %v861 = vmul.f32 %v59, %v858
    %v862 = vmul.f32 %v60, %v858
    %v863 = vmul.f32 %v61, %v858
    %v864 = vmul.f32 %v62, %v858
    %v865 = vmul.f32 %v63, %v858
    %v866 = vmul.f32 %v64, %v858
    %v867 = vmul.f32 %v65, %v858
    %v868 = vmul.f32 %v66, %v858
    %v869 = vmul.f32 %v67, %v858
    %v870 = vmul.f32 %v68, %v858
    %v871 = vmul.f32 %v69, %v858
    %v872 = vmul.f32 %v70, %v858
    %v873 = vmul.f32 %v71, %v858
    %v874 = vmul.f32 %v72, %v858
    %v875 = vmul.f32 %v73, %v858
    %v876 = vmul.f32 %v74, %v858
    %v877 = vmul.f32 %v75, %v858
    %v878 = vmul.f32 %v76, %v858
    %v879 = vmul.f32 %v77, %v858
    %v880 = vmul.f32 %v78, %v858
    %v881 = vmul.f32 %v79, %v858
    %v882 = vmul.f32 %v80, %v858
    %v883 = vmul.f32 %v81, %v858
    %v884 = vmul.f32 %v82, %v858
    %v885 = vmul.f32 %v83, %v858
    %v886 = vmul.f32 %v84, %v858
    %v915 = vrot.slane %v859, 1
    %v916 = vrot.slane %v860, 1
    %v917 = vsel %vm173, %v915, %v916
    %v918 = vrot.slane %v861, 1
    %v919 = vrot.slane %v862, 1
    %v920 = vsel %vm173, %v918, %v919
    %v921 = vrot.slane %v863, 1
    %v922 = vrot.slane %v864, 1
    %v923 = vsel %vm173, %v921, %v922
    %v924 = vrot.slane %v865, 1
    %v925 = vrot.slane %v866, 1
    %v926 = vsel %vm173, %v924, %v925
    %v927 = vrot.slane %v867, 1
    %v928 = vrot.slane %v868, 1
    %v929 = vsel %vm173, %v927, %v928
    %v930 = vrot.slane %v869, 1
    %v931 = vrot.slane %v870, 1
    %v932 = vsel %vm173, %v930, %v931
    %v933 = vrot.slane %v871, 1
    %v934 = vrot.slane %v872, 1
    %v935 = vsel %vm173, %v933, %v934
    %v936 = vrot.slane %v873, 1
    %v937 = vrot.slane %v874, 1
    %v938 = vsel %vm173, %v936, %v937
    %v939 = vrot.slane %v875, 1
    %v940 = vrot.slane %v876, 1
    %v941 = vsel %vm173, %v939, %v940
    %v942 = vrot.slane %v877, 1
    %v943 = vrot.slane %v878, 1
    %v944 = vsel %vm173, %v942, %v943
    %v945 = vrot.slane %v879, 1
    %v946 = vrot.slane %v880, 1
    %v947 = vsel %vm173, %v945, %v946
    %v948 = vrot.slane %v881, 1
    %v949 = vrot.slane %v882, 1
    %v950 = vsel %vm173, %v948, %v949
    %v951 = vrot.slane %v883, 1
    %v952 = vrot.slane %v884, 1
    %v953 = vsel %vm173, %v951, %v952
    %v954 = vrot.slane %v885, 1
    %v955 = vrot.slane %v886, 1
    %v956 = vsel %vm173, %v954, %v955
    %v985 = vadd.f32 %v829, %v917
    %v986 = vadd.f32 %v830, %v916
    %v987 = vadd.f32 %v831, %v920
    %v988 = vadd.f32 %v832, %v919
    %v989 = vadd.f32 %v833, %v923
    %v990 = vadd.f32 %v834, %v922
    %v991 = vadd.f32 %v835, %v926
    %v992 = vadd.f32 %v836, %v925
    %v993 = vadd.f32 %v837, %v929
    %v994 = vadd.f32 %v838, %v928
    %v995 = vadd.f32 %v839, %v932
    %v996 = vadd.f32 %v840, %v931
    %v997 = vadd.f32 %v841, %v935
    %v998 = vadd.f32 %v842, %v934
    %v999 = vadd.f32 %v843, %v938
    %v1000 = vadd.f32 %v844, %v937
    %v1001 = vadd.f32 %v845, %v941
    %v1002 = vadd.f32 %v846, %v940
    %v1003 = vadd.f32 %v847, %v944
    %v1004 = vadd.f32 %v848, %v943
    %v1005 = vadd.f32 %v849, %v947
    %v1006 = vadd.f32 %v850, %v946
    %v1007 = vadd.f32 %v851, %v950
    %v1008 = vadd.f32 %v852, %v949
    %v1009 = vadd.f32 %v853, %v953
    %v1010 = vadd.f32 %v854, %v952
    %v1011 = vadd.f32 %v855, %v956
    %v1012 = vadd.f32 %v856, %v955
    %s1013 = sld [smem:[#allocation6 + $0x8]]
    %v1014 = vstv %s1013
    %v1015 = vmul.f32 %v57, %v1014
    %v1016 = vmul.f32 %v58, %v1014
    %v1017 = vmul.f32 %v59, %v1014
    %v1018 = vmul.f32 %v60, %v1014
    %v1019 = vmul.f32 %v61, %v1014
    %v1020 = vmul.f32 %v62, %v1014
    %v1021 = vmul.f32 %v63, %v1014
    %v1022 = vmul.f32 %v64, %v1014
    %v1023 = vmul.f32 %v65, %v1014
    %v1024 = vmul.f32 %v66, %v1014
    %v1025 = vmul.f32 %v67, %v1014
    %v1026 = vmul.f32 %v68, %v1014
    %v1027 = vmul.f32 %v69, %v1014
    %v1028 = vmul.f32 %v70, %v1014
    %v1029 = vmul.f32 %v71, %v1014
    %v1030 = vmul.f32 %v72, %v1014
    %v1031 = vmul.f32 %v73, %v1014
    %v1032 = vmul.f32 %v74, %v1014
    %v1033 = vmul.f32 %v75, %v1014
    %v1034 = vmul.f32 %v76, %v1014
    %v1035 = vmul.f32 %v77, %v1014
    %v1036 = vmul.f32 %v78, %v1014
    %v1037 = vmul.f32 %v79, %v1014
    %v1038 = vmul.f32 %v80, %v1014
    %v1039 = vmul.f32 %v81, %v1014
    %v1040 = vmul.f32 %v82, %v1014
    %v1041 = vmul.f32 %v83, %v1014
    %v1042 = vmul.f32 %v84, %v1014
    %v1071 = vrot.slane %v1015, 2
    %v1072 = vrot.slane %v1016, 2
    %v1073 = vsel %vm330, %v1071, %v1072
    %v1074 = vrot.slane %v1017, 2
    %v1075 = vrot.slane %v1018, 2
    %v1076 = vsel %vm330, %v1074, %v1075
    %v1077 = vrot.slane %v1019, 2
    %v1078 = vrot.slane %v1020, 2
    %v1079 = vsel %vm330, %v1077, %v1078
    %v1080 = vrot.slane %v1021, 2
    %v1081 = vrot.slane %v1022, 2
    %v1082 = vsel %vm330, %v1080, %v1081
    %v1083 = vrot.slane %v1023, 2
    %v1084 = vrot.slane %v1024, 2
    %v1085 = vsel %vm330, %v1083, %v1084
    %v1086 = vrot.slane %v1025, 2
    %v1087 = vrot.slane %v1026, 2
    %v1088 = vsel %vm330, %v1086, %v1087
    %v1089 = vrot.slane %v1027, 2
    %v1090 = vrot.slane %v1028, 2
    %v1091 = vsel %vm330, %v1089, %v1090
    %v1092 = vrot.slane %v1029, 2
    %v1093 = vrot.slane %v1030, 2
    %v1094 = vsel %vm330, %v1092, %v1093
    %v1095 = vrot.slane %v1031, 2
    %v1096 = vrot.slane %v1032, 2
    %v1097 = vsel %vm330, %v1095, %v1096
    %v1098 = vrot.slane %v1033, 2
    %v1099 = vrot.slane %v1034, 2
    %v1100 = vsel %vm330, %v1098, %v1099
    %v1101 = vrot.slane %v1035, 2
    %v1102 = vrot.slane %v1036, 2
    %v1103 = vsel %vm330, %v1101, %v1102
    %v1104 = vrot.slane %v1037, 2
    %v1105 = vrot.slane %v1038, 2
    %v1106 = vsel %vm330, %v1104, %v1105
    %v1107 = vrot.slane %v1039, 2
    %v1108 = vrot.slane %v1040, 2
    %v1109 = vsel %vm330, %v1107, %v1108
    %v1110 = vrot.slane %v1041, 2
    %v1111 = vrot.slane %v1042, 2
    %v1112 = vsel %vm330, %v1110, %v1111
    %v1141 = vadd.f32 %v985, %v1073
    %v1142 = vadd.f32 %v986, %v1072
    %v1143 = vadd.f32 %v987, %v1076
    %v1144 = vadd.f32 %v988, %v1075
    %v1145 = vadd.f32 %v989, %v1079
    %v1146 = vadd.f32 %v990, %v1078
    %v1147 = vadd.f32 %v991, %v1082
    %v1148 = vadd.f32 %v992, %v1081
    %v1149 = vadd.f32 %v993, %v1085
    %v1150 = vadd.f32 %v994, %v1084
    %v1151 = vadd.f32 %v995, %v1088
    %v1152 = vadd.f32 %v996, %v1087
    %v1153 = vadd.f32 %v997, %v1091
    %v1154 = vadd.f32 %v998, %v1090
    %v1155 = vadd.f32 %v999, %v1094
    %v1156 = vadd.f32 %v1000, %v1093
    %v1157 = vadd.f32 %v1001, %v1097
    %v1158 = vadd.f32 %v1002, %v1096
    %v1159 = vadd.f32 %v1003, %v1100
    %v1160 = vadd.f32 %v1004, %v1099
    %v1161 = vadd.f32 %v1005, %v1103
    %v1162 = vadd.f32 %v1006, %v1102
    %v1163 = vadd.f32 %v1007, %v1106
    %v1164 = vadd.f32 %v1008, %v1105
    %v1165 = vadd.f32 %v1009, %v1109
    %v1166 = vadd.f32 %v1010, %v1108
    %v1167 = vadd.f32 %v1011, %v1112
    %v1168 = vadd.f32 %v1012, %v1111
    %s1169 = sld [smem:[#allocation4]]
    %v1170 = vstv %s1169
    %v1171 = vadd.f32 %v1141, %v1170
    %v1172 = vadd.f32 %v1142, %v1170
    %v1173 = vadd.f32 %v1143, %v1170
    %v1174 = vadd.f32 %v1144, %v1170
    %v1175 = vadd.f32 %v1145, %v1170
    %v1176 = vadd.f32 %v1146, %v1170
    %v1177 = vadd.f32 %v1147, %v1170
    %v1178 = vadd.f32 %v1148, %v1170
    %v1179 = vadd.f32 %v1149, %v1170
    %v1180 = vadd.f32 %v1150, %v1170
    %v1181 = vadd.f32 %v1151, %v1170
    %v1182 = vadd.f32 %v1152, %v1170
    %v1183 = vadd.f32 %v1153, %v1170
    %v1184 = vadd.f32 %v1154, %v1170
    %v1185 = vadd.f32 %v1155, %v1170
    %v1186 = vadd.f32 %v1156, %v1170
    %v1187 = vadd.f32 %v1157, %v1170
    %v1188 = vadd.f32 %v1158, %v1170
    %v1189 = vadd.f32 %v1159, %v1170
    %v1190 = vadd.f32 %v1160, %v1170
    %v1191 = vadd.f32 %v1161, %v1170
    %v1192 = vadd.f32 %v1162, %v1170
    %v1193 = vadd.f32 %v1163, %v1170
    %v1194 = vadd.f32 %v1164, %v1170
    %v1195 = vadd.f32 %v1165, %v1170
    %v1196 = vadd.f32 %v1166, %v1170
    %v1197 = vadd.f32 %v1167, %v1170
    %v1198 = vadd.f32 %v1168, %v1170
    %v1199 = vmax.f32 %v1171, 0.0
    %v1200 = vmax.f32 %v1172, 0.0
    %v1201 = vmax.f32 %v1173, 0.0
    %v1202 = vmax.f32 %v1174, 0.0
    %v1203 = vmax.f32 %v1175, 0.0
    %v1204 = vmax.f32 %v1176, 0.0
    %v1205 = vmax.f32 %v1177, 0.0
    %v1206 = vmax.f32 %v1178, 0.0
    %v1207 = vmax.f32 %v1179, 0.0
    %v1208 = vmax.f32 %v1180, 0.0
    %v1209 = vmax.f32 %v1181, 0.0
    %v1210 = vmax.f32 %v1182, 0.0
    %v1211 = vmax.f32 %v1183, 0.0
    %v1212 = vmax.f32 %v1184, 0.0
    %v1213 = vmax.f32 %v1185, 0.0
    %v1214 = vmax.f32 %v1186, 0.0
    %v1215 = vmax.f32 %v1187, 0.0
    %v1216 = vmax.f32 %v1188, 0.0
    %v1217 = vmax.f32 %v1189, 0.0
    %v1218 = vmax.f32 %v1190, 0.0
    %v1219 = vmax.f32 %v1191, 0.0
    %v1220 = vmax.f32 %v1192, 0.0
    %v1221 = vmax.f32 %v1193, 0.0
    %v1222 = vmax.f32 %v1194, 0.0
    %v1223 = vmax.f32 %v1195, 0.0
    %v1224 = vmax.f32 %v1196, 0.0
    %v1225 = vmax.f32 %v1197, 0.0
    %v1226 = vmax.f32 %v1198, 0.0
    %s1227 = sld [smem:[#allocation8]]
    %v1228 = vstv %s1227
    %v1229 = vmul.f32 %v1199, %v1228
    %v1230 = vmul.f32 %v1200, %v1228
    %v1231 = vmul.f32 %v1201, %v1228
    %v1232 = vmul.f32 %v1202, %v1228
    %v1233 = vmul.f32 %v1203, %v1228
    %v1234 = vmul.f32 %v1204, %v1228
    %v1235 = vmul.f32 %v1205, %v1228
    %v1236 = vmul.f32 %v1206, %v1228
    %v1237 = vmul.f32 %v1207, %v1228
    %v1238 = vmul.f32 %v1208, %v1228
    %v1239 = vmul.f32 %v1209, %v1228
    %v1240 = vmul.f32 %v1210, %v1228
    %v1241 = vmul.f32 %v1211, %v1228
    %v1242 = vmul.f32 %v1212, %v1228
    %v1243 = vmul.f32 %v1213, %v1228
    %v1244 = vmul.f32 %v1214, %v1228
    %v1245 = vmul.f32 %v1215, %v1228
    %v1246 = vmul.f32 %v1216, %v1228
    %v1247 = vmul.f32 %v1217, %v1228
    %v1248 = vmul.f32 %v1218, %v1228
    %v1249 = vmul.f32 %v1219, %v1228
    %v1250 = vmul.f32 %v1220, %v1228
    %v1251 = vmul.f32 %v1221, %v1228
    %v1252 = vmul.f32 %v1222, %v1228
    %s1253 = sld [smem:[#allocation8 + $0x1]]
    %v1254 = vstv %s1253
    %v1255 = vmul.f32 %v1199, %v1254
    %v1256 = vmul.f32 %v1200, %v1254
    %v1257 = vmul.f32 %v1201, %v1254
    %v1258 = vmul.f32 %v1202, %v1254
    %v1259 = vmul.f32 %v1203, %v1254
    %v1260 = vmul.f32 %v1204, %v1254
    %v1261 = vmul.f32 %v1205, %v1254
    %v1262 = vmul.f32 %v1206, %v1254
    %v1263 = vmul.f32 %v1207, %v1254
    %v1264 = vmul.f32 %v1208, %v1254
    %v1265 = vmul.f32 %v1209, %v1254
    %v1266 = vmul.f32 %v1210, %v1254
    %v1267 = vmul.f32 %v1211, %v1254
    %v1268 = vmul.f32 %v1212, %v1254
    %v1269 = vmul.f32 %v1213, %v1254
    %v1270 = vmul.f32 %v1214, %v1254
    %v1271 = vmul.f32 %v1215, %v1254
    %v1272 = vmul.f32 %v1216, %v1254
    %v1273 = vmul.f32 %v1217, %v1254
    %v1274 = vmul.f32 %v1218, %v1254
    %v1275 = vmul.f32 %v1219, %v1254
    %v1276 = vmul.f32 %v1220, %v1254
    %v1277 = vmul.f32 %v1221, %v1254
    %v1278 = vmul.f32 %v1222, %v1254
    %v1303 = vrot.slane %v1255, 1
    %v1304 = vrot.slane %v1256, 1
    %v1305 = vsel %vm173, %v1303, %v1304
    %v1306 = vrot.slane %v1257, 1
    %v1307 = vrot.slane %v1258, 1
    %v1308 = vsel %vm173, %v1306, %v1307
    %v1309 = vrot.slane %v1259, 1
    %v1310 = vrot.slane %v1260, 1
    %v1311 = vsel %vm173, %v1309, %v1310
    %v1312 = vrot.slane %v1261, 1
    %v1313 = vrot.slane %v1262, 1
    %v1314 = vsel %vm173, %v1312, %v1313
    %v1315 = vrot.slane %v1263, 1
    %v1316 = vrot.slane %v1264, 1
    %v1317 = vsel %vm173, %v1315, %v1316
    %v1318 = vrot.slane %v1265, 1
    %v1319 = vrot.slane %v1266, 1
    %v1320 = vsel %vm173, %v1318, %v1319
    %v1321 = vrot.slane %v1267, 1
    %v1322 = vrot.slane %v1268, 1
    %v1323 = vsel %vm173, %v1321, %v1322
    %v1324 = vrot.slane %v1269, 1
    %v1325 = vrot.slane %v1270, 1
    %v1326 = vsel %vm173, %v1324, %v1325
    %v1327 = vrot.slane %v1271, 1
    %v1328 = vrot.slane %v1272, 1
    %v1329 = vsel %vm173, %v1327, %v1328
    %v1330 = vrot.slane %v1273, 1
    %v1331 = vrot.slane %v1274, 1
    %v1332 = vsel %vm173, %v1330, %v1331
    %v1333 = vrot.slane %v1275, 1
    %v1334 = vrot.slane %v1276, 1
    %v1335 = vsel %vm173, %v1333, %v1334
    %v1336 = vrot.slane %v1277, 1
    %v1337 = vrot.slane %v1278, 1
    %v1338 = vsel %vm173, %v1336, %v1337
    %v1363 = vadd.f32 %v1229, %v1305
    %v1364 = vadd.f32 %v1230, %v1304
    %v1365 = vadd.f32 %v1231, %v1308
    %v1366 = vadd.f32 %v1232, %v1307
    %v1367 = vadd.f32 %v1233, %v1311
    %v1368 = vadd.f32 %v1234, %v1310
    %v1369 = vadd.f32 %v1235, %v1314
    %v1370 = vadd.f32 %v1236, %v1313
    %v1371 = vadd.f32 %v1237, %v1317
    %v1372 = vadd.f32 %v1238, %v1316
    %v1373 = vadd.f32 %v1239, %v1320
    %v1374 = vadd.f32 %v1240, %v1319
    %v1375 = vadd.f32 %v1241, %v1323
    %v1376 = vadd.f32 %v1242, %v1322
    %v1377 = vadd.f32 %v1243, %v1326
    %v1378 = vadd.f32 %v1244, %v1325
    %v1379 = vadd.f32 %v1245, %v1329
    %v1380 = vadd.f32 %v1246, %v1328
    %v1381 = vadd.f32 %v1247, %v1332
    %v1382 = vadd.f32 %v1248, %v1331
    %v1383 = vadd.f32 %v1249, %v1335
    %v1384 = vadd.f32 %v1250, %v1334
    %v1385 = vadd.f32 %v1251, %v1338
    %v1386 = vadd.f32 %v1252, %v1337
    %s1387 = sld [smem:[#allocation8 + $0x2]]
    %v1388 = vstv %s1387
    %v1389 = vmul.f32 %v1199, %v1388
    %v1390 = vmul.f32 %v1200, %v1388
    %v1391 = vmul.f32 %v1201, %v1388
    %v1392 = vmul.f32 %v1202, %v1388
    %v1393 = vmul.f32 %v1203, %v1388
    %v1394 = vmul.f32 %v1204, %v1388
    %v1395 = vmul.f32 %v1205, %v1388
    %v1396 = vmul.f32 %v1206, %v1388
    %v1397 = vmul.f32 %v1207, %v1388
    %v1398 = vmul.f32 %v1208, %v1388
    %v1399 = vmul.f32 %v1209, %v1388
    %v1400 = vmul.f32 %v1210, %v1388
    %v1401 = vmul.f32 %v1211, %v1388
    %v1402 = vmul.f32 %v1212, %v1388
    %v1403 = vmul.f32 %v1213, %v1388
    %v1404 = vmul.f32 %v1214, %v1388
    %v1405 = vmul.f32 %v1215, %v1388
    %v1406 = vmul.f32 %v1216, %v1388
    %v1407 = vmul.f32 %v1217, %v1388
    %v1408 = vmul.f32 %v1218, %v1388
    %v1409 = vmul.f32 %v1219, %v1388
    %v1410 = vmul.f32 %v1220, %v1388
    %v1411 = vmul.f32 %v1221, %v1388
    %v1412 = vmul.f32 %v1222, %v1388
    %v1437 = vrot.slane %v1389, 2
    %v1438 = vrot.slane %v1390, 2
    %v1439 = vsel %vm330, %v1437, %v1438
    %v1440 = vrot.slane %v1391, 2
    %v1441 = vrot.slane %v1392, 2
    %v1442 = vsel %vm330, %v1440, %v1441
    %v1443 = vrot.slane %v1393, 2
    %v1444 = vrot.slane %v1394, 2
    %v1445 = vsel %vm330, %v1443, %v1444
    %v1446 = vrot.slane %v1395, 2
    %v1447 = vrot.slane %v1396, 2
    %v1448 = vsel %vm330, %v1446, %v1447
    %v1449 = vrot.slane %v1397, 2
    %v1450 = vrot.slane %v1398, 2
    %v1451 = vsel %vm330, %v1449, %v1450
    %v1452 = vrot.slane %v1399, 2
    %v1453 = vrot.slane %v1400, 2
    %v1454 = vsel %vm330, %v1452, %v1453
    %v1455 = vrot.slane %v1401, 2
    %v1456 = vrot.slane %v1402, 2
    %v1457 = vsel %vm330, %v1455, %v1456
    %v1458 = vrot.slane %v1403, 2
    %v1459 = vrot.slane %v1404, 2
    %v1460 = vsel %vm330, %v1458, %v1459
    %v1461 = vrot.slane %v1405, 2
    %v1462 = vrot.slane %v1406, 2
    %v1463 = vsel %vm330, %v1461, %v1462
    %v1464 = vrot.slane %v1407, 2
    %v1465 = vrot.slane %v1408, 2
    %v1466 = vsel %vm330, %v1464, %v1465
    %v1467 = vrot.slane %v1409, 2
    %v1468 = vrot.slane %v1410, 2
    %v1469 = vsel %vm330, %v1467, %v1468
    %v1470 = vrot.slane %v1411, 2
    %v1471 = vrot.slane %v1412, 2
    %v1472 = vsel %vm330, %v1470, %v1471
    %v1497 = vadd.f32 %v1363, %v1439
    %v1498 = vadd.f32 %v1364, %v1438
    %v1499 = vadd.f32 %v1365, %v1442
    %v1500 = vadd.f32 %v1366, %v1441
    %v1501 = vadd.f32 %v1367, %v1445
    %v1502 = vadd.f32 %v1368, %v1444
    %v1503 = vadd.f32 %v1369, %v1448
    %v1504 = vadd.f32 %v1370, %v1447
    %v1505 = vadd.f32 %v1371, %v1451
    %v1506 = vadd.f32 %v1372, %v1450
    %v1507 = vadd.f32 %v1373, %v1454
    %v1508 = vadd.f32 %v1374, %v1453
    %v1509 = vadd.f32 %v1375, %v1457
    %v1510 = vadd.f32 %v1376, %v1456
    %v1511 = vadd.f32 %v1377, %v1460
    %v1512 = vadd.f32 %v1378, %v1459
    %v1513 = vadd.f32 %v1379, %v1463
    %v1514 = vadd.f32 %v1380, %v1462
    %v1515 = vadd.f32 %v1381, %v1466
    %v1516 = vadd.f32 %v1382, %v1465
    %v1517 = vadd.f32 %v1383, %v1469
    %v1518 = vadd.f32 %v1384, %v1468
    %v1519 = vadd.f32 %v1385, %v1472
    %v1520 = vadd.f32 %v1386, %v1471
    %s1521 = sld [smem:[#allocation8 + $0x3]]
    %v1522 = vstv %s1521
    %v1523 = vmul.f32 %v1201, %v1522
    %v1524 = vmul.f32 %v1202, %v1522
    %v1525 = vmul.f32 %v1203, %v1522
    %v1526 = vmul.f32 %v1204, %v1522
    %v1527 = vmul.f32 %v1205, %v1522
    %v1528 = vmul.f32 %v1206, %v1522
    %v1529 = vmul.f32 %v1207, %v1522
    %v1530 = vmul.f32 %v1208, %v1522
    %v1531 = vmul.f32 %v1209, %v1522
    %v1532 = vmul.f32 %v1210, %v1522
    %v1533 = vmul.f32 %v1211, %v1522
    %v1534 = vmul.f32 %v1212, %v1522
    %v1535 = vmul.f32 %v1213, %v1522
    %v1536 = vmul.f32 %v1214, %v1522
    %v1537 = vmul.f32 %v1215, %v1522
    %v1538 = vmul.f32 %v1216, %v1522
    %v1539 = vmul.f32 %v1217, %v1522
    %v1540 = vmul.f32 %v1218, %v1522
    %v1541 = vmul.f32 %v1219, %v1522
    %v1542 = vmul.f32 %v1220, %v1522
    %v1543 = vmul.f32 %v1221, %v1522
    %v1544 = vmul.f32 %v1222, %v1522
    %v1545 = vmul.f32 %v1223, %v1522
    %v1546 = vmul.f32 %v1224, %v1522
    %v1547 = vadd.f32 %v1497, %v1523
    %v1548 = vadd.f32 %v1498, %v1524
    %v1549 = vadd.f32 %v1499, %v1525
    %v1550 = vadd.f32 %v1500, %v1526
    %v1551 = vadd.f32 %v1501, %v1527
    %v1552 = vadd.f32 %v1502, %v1528
    %v1553 = vadd.f32 %v1503, %v1529
    %v1554 = vadd.f32 %v1504, %v1530
    %v1555 = vadd.f32 %v1505, %v1531
    %v1556 = vadd.f32 %v1506, %v1532
    %v1557 = vadd.f32 %v1507, %v1533
    %v1558 = vadd.f32 %v1508, %v1534
    %v1559 = vadd.f32 %v1509, %v1535
    %v1560 = vadd.f32 %v1510, %v1536
    %v1561 = vadd.f32 %v1511, %v1537
    %v1562 = vadd.f32 %v1512, %v1538
    %v1563 = vadd.f32 %v1513, %v1539
    %v1564 = vadd.f32 %v1514, %v1540
    %v1565 = vadd.f32 %v1515, %v1541
    %v1566 = vadd.f32 %v1516, %v1542
    %v1567 = vadd.f32 %v1517, %v1543
    %v1568 = vadd.f32 %v1518, %v1544
    %v1569 = vadd.f32 %v1519, %v1545
    %v1570 = vadd.f32 %v1520, %v1546
    %s1571 = sld [smem:[#allocation8 + $0x4]]
    %v1572 = vstv %s1571
    %v1573 = vmul.f32 %v1201, %v1572
    %v1574 = vmul.f32 %v1202, %v1572
    %v1575 = vmul.f32 %v1203, %v1572
    %v1576 = vmul.f32 %v1204, %v1572
    %v1577 = vmul.f32 %v1205, %v1572
    %v1578 = vmul.f32 %v1206, %v1572
    %v1579 = vmul.f32 %v1207, %v1572
    %v1580 = vmul.f32 %v1208, %v1572
    %v1581 = vmul.f32 %v1209, %v1572
    %v1582 = vmul.f32 %v1210, %v1572
    %v1583 = vmul.f32 %v1211, %v1572
    %v1584 = vmul.f32 %v1212, %v1572
    %v1585 = vmul.f32 %v1213, %v1572
    %v1586 = vmul.f32 %v1214, %v1572
    %v1587 = vmul.f32 %v1215, %v1572
    %v1588 = vmul.f32 %v1216, %v1572
    %v1589 = vmul.f32 %v1217, %v1572
    %v1590 = vmul.f32 %v1218, %v1572
    %v1591 = vmul.f32 %v1219, %v1572
    %v1592 = vmul.f32 %v1220, %v1572
    %v1593 = vmul.f32 %v1221, %v1572
    %v1594 = vmul.f32 %v1222, %v1572
    %v1595 = vmul.f32 %v1223, %v1572
    %v1596 = vmul.f32 %v1224, %v1572
    %v1621 = vrot.slane %v1573, 1
    %v1622 = vrot.slane %v1574, 1
    %v1623 = vsel %vm173, %v1621, %v1622
    %v1624 = vrot.slane %v1575, 1
    %v1625 = vrot.slane %v1576, 1
    %v1626 = vsel %vm173, %v1624, %v1625
    %v1627 = vrot.slane %v1577, 1
    %v1628 = vrot.slane %v1578, 1
    %v1629 = vsel %vm173, %v1627, %v1628
    %v1630 = vrot.slane %v1579, 1
    %v1631 = vrot.slane %v1580, 1
    %v1632 = vsel %vm173, %v1630, %v1631
    %v1633 = vrot.slane %v1581, 1
    %v1634 = vrot.slane %v1582, 1
    %v1635 = vsel %vm173, %v1633, %v1634
    %v1636 = vrot.slane %v1583, 1
    %v1637 = vrot.slane %v1584, 1
    %v1638 = vsel %vm173, %v1636, %v1637
    %v1639 = vrot.slane %v1585, 1
    %v1640 = vrot.slane %v1586, 1
    %v1641 = vsel %vm173, %v1639, %v1640
    %v1642 = vrot.slane %v1587, 1
    %v1643 = vrot.slane %v1588, 1
    %v1644 = vsel %vm173, %v1642, %v1643
    %v1645 = vrot.slane %v1589, 1
    %v1646 = vrot.slane %v1590, 1
    %v1647 = vsel %vm173, %v1645, %v1646
    %v1648 = vrot.slane %v1591, 1
    %v1649 = vrot.slane %v1592, 1
    %v1650 = vsel %vm173, %v1648, %v1649
    %v1651 = vrot.slane %v1593, 1
    %v1652 = vrot.slane %v1594, 1
    %v1653 = vsel %vm173, %v1651, %v1652
    %v1654 = vrot.slane %v1595, 1
    %v1655 = vrot.slane %v1596, 1
    %v1656 = vsel %vm173, %v1654, %v1655
    %v1681 = vadd.f32 %v1547, %v1623
    %v1682 = vadd.f32 %v1548, %v1622
    %v1683 = vadd.f32 %v1549, %v1626
    %v1684 = vadd.f32 %v1550, %v1625
    %v1685 = vadd.f32 %v1551, %v1629
    %v1686 = vadd.f32 %v1552, %v1628
    %v1687 = vadd.f32 %v1553, %v1632
    %v1688 = vadd.f32 %v1554, %v1631
    %v1689 = vadd.f32 %v1555, %v1635
    %v1690 = vadd.f32 %v1556, %v1634
    %v1691 = vadd.f32 %v1557, %v1638
    %v1692 = vadd.f32 %v1558, %v1637
    %v1693 = vadd.f32 %v1559, %v1641
    %v1694 = vadd.f32 %v1560, %v1640
    %v1695 = vadd.f32 %v1561, %v1644
    %v1696 = vadd.f32 %v1562, %v1643
    %v1697 = vadd.f32 %v1563, %v1647
    %v1698 = vadd.f32 %v1564, %v1646
    %v1699 = vadd.f32 %v1565, %v1650
    %v1700 = vadd.f32 %v1566, %v1649
    %v1701 = vadd.f32 %v1567, %v1653
    %v1702 = vadd.f32 %v1568, %v1652
    %v1703 = vadd.f32 %v1569, %v1656
    %v1704 = vadd.f32 %v1570, %v1655
    %s1705 = sld [smem:[#allocation8 + $0x5]]
    %v1706 = vstv %s1705
    %v1707 = vmul.f32 %v1201, %v1706
    %v1708 = vmul.f32 %v1202, %v1706
    %v1709 = vmul.f32 %v1203, %v1706
    %v1710 = vmul.f32 %v1204, %v1706
    %v1711 = vmul.f32 %v1205, %v1706
    %v1712 = vmul.f32 %v1206, %v1706
    %v1713 = vmul.f32 %v1207, %v1706
    %v1714 = vmul.f32 %v1208, %v1706
    %v1715 = vmul.f32 %v1209, %v1706
    %v1716 = vmul.f32 %v1210, %v1706
    %v1717 = vmul.f32 %v1211, %v1706
    %v1718 = vmul.f32 %v1212, %v1706
    %v1719 = vmul.f32 %v1213, %v1706
    %v1720 = vmul.f32 %v1214, %v1706
    %v1721 = vmul.f32 %v1215, %v1706
    %v1722 = vmul.f32 %v1216, %v1706
    %v1723 = vmul.f32 %v1217, %v1706
    %v1724 = vmul.f32 %v1218, %v1706
    %v1725 = vmul.f32 %v1219, %v1706
    %v1726 = vmul.f32 %v1220, %v1706
    %v1727 = vmul.f32 %v1221, %v1706
    %v1728 = vmul.f32 %v1222, %v1706
    %v1729 = vmul.f32 %v1223, %v1706
    %v1730 = vmul.f32 %v1224, %v1706
    %v1755 = vrot.slane %v1707, 2
    %v1756 = vrot.slane %v1708, 2
    %v1757 = vsel %vm330, %v1755, %v1756
    %v1758 = vrot.slane %v1709, 2
    %v1759 = vrot.slane %v1710, 2
    %v1760 = vsel %vm330, %v1758, %v1759
    %v1761 = vrot.slane %v1711, 2
    %v1762 = vrot.slane %v1712, 2
    %v1763 = vsel %vm330, %v1761, %v1762
    %v1764 = vrot.slane %v1713, 2
    %v1765 = vrot.slane %v1714, 2
    %v1766 = vsel %vm330, %v1764, %v1765
    %v1767 = vrot.slane %v1715, 2
    %v1768 = vrot.slane %v1716, 2
    %v1769 = vsel %vm330, %v1767, %v1768
    %v1770 = vrot.slane %v1717, 2
    %v1771 = vrot.slane %v1718, 2
    %v1772 = vsel %vm330, %v1770, %v1771
    %v1773 = vrot.slane %v1719, 2
    %v1774 = vrot.slane %v1720, 2
    %v1775 = vsel %vm330, %v1773, %v1774
    %v1776 = vrot.slane %v1721, 2
    %v1777 = vrot.slane %v1722, 2
    %v1778 = vsel %vm330, %v1776, %v1777
    %v1779 = vrot.slane %v1723, 2
    %v1780 = vrot.slane %v1724, 2
    %v1781 = vsel %vm330, %v1779, %v1780
    %v1782 = vrot.slane %v1725, 2
    %v1783 = vrot.slane %v1726, 2
    %v1784 = vsel %vm330, %v1782, %v1783
    %v1785 = vrot.slane %v1727, 2
    %v1786 = vrot.slane %v1728, 2
    %v1787 = vsel %vm330, %v1785, %v1786
    %v1788 = vrot.slane %v1729, 2
    %v1789 = vrot.slane %v1730, 2
    %v1790 = vsel %vm330, %v1788, %v1789
    %v1815 = vadd.f32 %v1681, %v1757
    %v1816 = vadd.f32 %v1682, %v1756
    %v1817 = vadd.f32 %v1683, %v1760
    %v1818 = vadd.f32 %v1684, %v1759
    %v1819 = vadd.f32 %v1685, %v1763
    %v1820 = vadd.f32 %v1686, %v1762
    %v1821 = vadd.f32 %v1687, %v1766
    %v1822 = vadd.f32 %v1688, %v1765
    %v1823 = vadd.f32 %v1689, %v1769
    %v1824 = vadd.f32 %v1690, %v1768
    %v1825 = vadd.f32 %v1691, %v1772
    %v1826 = vadd.f32 %v1692, %v1771
    %v1827 = vadd.f32 %v1693, %v1775
    %v1828 = vadd.f32 %v1694, %v1774
    %v1829 = vadd.f32 %v1695, %v1778
    %v1830 = vadd.f32 %v1696, %v1777
    %v1831 = vadd.f32 %v1697, %v1781
    %v1832 = vadd.f32 %v1698, %v1780
    %v1833 = vadd.f32 %v1699, %v1784
    %v1834 = vadd.f32 %v1700, %v1783
    %v1835 = vadd.f32 %v1701, %v1787
    %v1836 = vadd.f32 %v1702, %v1786
    %v1837 = vadd.f32 %v1703, %v1790
    %v1838 = vadd.f32 %v1704, %v1789
    %s1839 = sld [smem:[#allocation8 + $0x6]]
    %v1840 = vstv %s1839
    %v1841 = vmul.f32 %v1203, %v1840
    %v1842 = vmul.f32 %v1204, %v1840
    %v1843 = vmul.f32 %v1205, %v1840
    %v1844 = vmul.f32 %v1206, %v1840
    %v1845 = vmul.f32 %v1207, %v1840
    %v1846 = vmul.f32 %v1208, %v1840
    %v1847 = vmul.f32 %v1209, %v1840
    %v1848 = vmul.f32 %v1210, %v1840
    %v1849 = vmul.f32 %v1211, %v1840
    %v1850 = vmul.f32 %v1212, %v1840
    %v1851 = vmul.f32 %v1213, %v1840
    %v1852 = vmul.f32 %v1214, %v1840
    %v1853 = vmul.f32 %v1215, %v1840
    %v1854 = vmul.f32 %v1216, %v1840
    %v1855 = vmul.f32 %v1217, %v1840
    %v1856 = vmul.f32 %v1218, %v1840
    %v1857 = vmul.f32 %v1219, %v1840
    %v1858 = vmul.f32 %v1220, %v1840
    %v1859 = vmul.f32 %v1221, %v1840
    %v1860 = vmul.f32 %v1222, %v1840
    %v1861 = vmul.f32 %v1223, %v1840
    %v1862 = vmul.f32 %v1224, %v1840
    %v1863 = vmul.f32 %v1225, %v1840
    %v1864 = vmul.f32 %v1226, %v1840
    %v1865 = vadd.f32 %v1815, %v1841
    %v1866 = vadd.f32 %v1816, %v1842
    %v1867 = vadd.f32 %v1817, %v1843
    %v1868 = vadd.f32 %v1818, %v1844
    %v1869 = vadd.f32 %v1819, %v1845
    %v1870 = vadd.f32 %v1820, %v1846
    %v1871 = vadd.f32 %v1821, %v1847
    %v1872 = vadd.f32 %v1822, %v1848
    %v1873 = vadd.f32 %v1823, %v1849
    %v1874 = vadd.f32 %v1824, %v1850
    %v1875 = vadd.f32 %v1825, %v1851
    %v1876 = vadd.f32 %v1826, %v1852
    %v1877 = vadd.f32 %v1827, %v1853
    %v1878 = vadd.f32 %v1828, %v1854
    %v1879 = vadd.f32 %v1829, %v1855
    %v1880 = vadd.f32 %v1830, %v1856
    %v1881 = vadd.f32 %v1831, %v1857
    %v1882 = vadd.f32 %v1832, %v1858
    %v1883 = vadd.f32 %v1833, %v1859
    %v1884 = vadd.f32 %v1834, %v1860
    %v1885 = vadd.f32 %v1835, %v1861
    %v1886 = vadd.f32 %v1836, %v1862
    %v1887 = vadd.f32 %v1837, %v1863
    %v1888 = vadd.f32 %v1838, %v1864
    %s1889 = sld [smem:[#allocation8 + $0x7]]
    %v1890 = vstv %s1889
    %v1891 = vmul.f32 %v1203, %v1890
    %v1892 = vmul.f32 %v1204, %v1890
    %v1893 = vmul.f32 %v1205, %v1890
    %v1894 = vmul.f32 %v1206, %v1890
    %v1895 = vmul.f32 %v1207, %v1890
    %v1896 = vmul.f32 %v1208, %v1890
    %v1897 = vmul.f32 %v1209, %v1890
    %v1898 = vmul.f32 %v1210, %v1890
    %v1899 = vmul.f32 %v1211, %v1890
    %v1900 = vmul.f32 %v1212, %v1890
    %v1901 = vmul.f32 %v1213, %v1890
    %v1902 = vmul.f32 %v1214, %v1890
    %v1903 = vmul.f32 %v1215, %v1890
    %v1904 = vmul.f32 %v1216, %v1890
    %v1905 = vmul.f32 %v1217, %v1890
    %v1906 = vmul.f32 %v1218, %v1890
    %v1907 = vmul.f32 %v1219, %v1890
    %v1908 = vmul.f32 %v1220, %v1890
    %v1909 = vmul.f32 %v1221, %v1890
    %v1910 = vmul.f32 %v1222, %v1890
    %v1911 = vmul.f32 %v1223, %v1890
    %v1912 = vmul.f32 %v1224, %v1890
    %v1913 = vmul.f32 %v1225, %v1890
    %v1914 = vmul.f32 %v1226, %v1890
    %v1939 = vrot.slane %v1891, 1
    %v1940 = vrot.slane %v1892, 1
    %v1941 = vsel %vm173, %v1939, %v1940
    %v1942 = vrot.slane %v1893, 1
    %v1943 = vrot.slane %v1894, 1
    %v1944 = vsel %vm173, %v1942, %v1943
    %v1945 = vrot.slane %v1895, 1
    %v1946 = vrot.slane %v1896, 1
    %v1947 = vsel %vm173, %v1945, %v1946
    %v1948 = vrot.slane %v1897, 1
    %v1949 = vrot.slane %v1898, 1
    %v1950 = vsel %vm173, %v1948, %v1949
    %v1951 = vrot.slane %v1899, 1
    %v1952 = vrot.slane %v1900, 1
    %v1953 = vsel %vm173, %v1951, %v1952
    %v1954 = vrot.slane %v1901, 1
    %v1955 = vrot.slane %v1902, 1
    %v1956 = vsel %vm173, %v1954, %v1955
    %v1957 = vrot.slane %v1903, 1
    %v1958 = vrot.slane %v1904, 1
    %v1959 = vsel %vm173, %v1957, %v1958
    %v1960 = vrot.slane %v1905, 1
    %v1961 = vrot.slane %v1906, 1
    %v1962 = vsel %vm173, %v1960, %v1961
    %v1963 = vrot.slane %v1907, 1
    %v1964 = vrot.slane %v1908, 1
    %v1965 = vsel %vm173, %v1963, %v1964
    %v1966 = vrot.slane %v1909, 1
    %v1967 = vrot.slane %v1910, 1
    %v1968 = vsel %vm173, %v1966, %v1967
    %v1969 = vrot.slane %v1911, 1
    %v1970 = vrot.slane %v1912, 1
    %v1971 = vsel %vm173, %v1969, %v1970
    %v1972 = vrot.slane %v1913, 1
    %v1973 = vrot.slane %v1914, 1
    %v1974 = vsel %vm173, %v1972, %v1973
    %v1999 = vadd.f32 %v1865, %v1941
    %v2000 = vadd.f32 %v1866, %v1940
    %v2001 = vadd.f32 %v1867, %v1944
    %v2002 = vadd.f32 %v1868, %v1943
    %v2003 = vadd.f32 %v1869, %v1947
    %v2004 = vadd.f32 %v1870, %v1946
    %v2005 = vadd.f32 %v1871, %v1950
    %v2006 = vadd.f32 %v1872, %v1949
    %v2007 = vadd.f32 %v1873, %v1953
    %v2008 = vadd.f32 %v1874, %v1952
    %v2009 = vadd.f32 %v1875, %v1956
    %v2010 = vadd.f32 %v1876, %v1955
    %v2011 = vadd.f32 %v1877, %v1959
    %v2012 = vadd.f32 %v1878, %v1958
    %v2013 = vadd.f32 %v1879, %v1962
    %v2014 = vadd.f32 %v1880, %v1961
    %v2015 = vadd.f32 %v1881, %v1965
    %v2016 = vadd.f32 %v1882, %v1964
    %v2017 = vadd.f32 %v1883, %v1968
    %v2018 = vadd.f32 %v1884, %v1967
    %v2019 = vadd.f32 %v1885, %v1971
    %v2020 = vadd.f32 %v1886, %v1970
    %v2021 = vadd.f32 %v1887, %v1974
    %v2022 = vadd.f32 %v1888, %v1973
    %s2023 = sld [smem:[#allocation8 + $0x8]]
    %v2024 = vstv %s2023
    %v2025 = vmul.f32 %v1203, %v2024
    %v2026 = vmul.f32 %v1204, %v2024
    %v2027 = vmul.f32 %v1205, %v2024
    %v2028 = vmul.f32 %v1206, %v2024
    %v2029 = vmul.f32 %v1207, %v2024
    %v2030 = vmul.f32 %v1208, %v2024
    %v2031 = vmul.f32 %v1209, %v2024
    %v2032 = vmul.f32 %v1210, %v2024
    %v2033 = vmul.f32 %v1211, %v2024
    %v2034 = vmul.f32 %v1212, %v2024
    %v2035 = vmul.f32 %v1213, %v2024
    %v2036 = vmul.f32 %v1214, %v2024
    %v2037 = vmul.f32 %v1215, %v2024
    %v2038 = vmul.f32 %v1216, %v2024
    %v2039 = vmul.f32 %v1217, %v2024
    %v2040 = vmul.f32 %v1218, %v2024
    %v2041 = vmul.f32 %v1219, %v2024
    %v2042 = vmul.f32 %v1220, %v2024
    %v2043 = vmul.f32 %v1221, %v2024
    %v2044 = vmul.f32 %v1222, %v2024
    %v2045 = vmul.f32 %v1223, %v2024
    %v2046 = vmul.f32 %v1224, %v2024
    %v2047 = vmul.f32 %v1225, %v2024
    %v2048 = vmul.f32 %v1226, %v2024
    %v2073 = vrot.slane %v2025, 2
    %v2074 = vrot.slane %v2026, 2
    %v2075 = vsel %vm330, %v2073, %v2074
    %v2076 = vrot.slane %v2027, 2
    %v2077 = vrot.slane %v2028, 2
    %v2078 = vsel %vm330, %v2076, %v2077
    %v2079 = vrot.slane %v2029, 2
    %v2080 = vrot.slane %v2030, 2
    %v2081 = vsel %vm330, %v2079, %v2080
    %v2082 = vrot.slane %v2031, 2
    %v2083 = vrot.slane %v2032, 2
    %v2084 = vsel %vm330, %v2082, %v2083
    %v2085 = vrot.slane %v2033, 2
    %v2086 = vrot.slane %v2034, 2
    %v2087 = vsel %vm330, %v2085, %v2086
    %v2088 = vrot.slane %v2035, 2
    %v2089 = vrot.slane %v2036, 2
    %v2090 = vsel %vm330, %v2088, %v2089
    %v2091 = vrot.slane %v2037, 2
    %v2092 = vrot.slane %v2038, 2
    %v2093 = vsel %vm330, %v2091, %v2092
    %v2094 = vrot.slane %v2039, 2
    %v2095 = vrot.slane %v2040, 2
    %v2096 = vsel %vm330, %v2094, %v2095
    %v2097 = vrot.slane %v2041, 2
    %v2098 = vrot.slane %v2042, 2
    %v2099 = vsel %vm330, %v2097, %v2098
    %v2100 = vrot.slane %v2043, 2
    %v2101 = vrot.slane %v2044, 2
    %v2102 = vsel %vm330, %v2100, %v2101
    %v2103 = vrot.slane %v2045, 2
    %v2104 = vrot.slane %v2046, 2
    %v2105 = vsel %vm330, %v2103, %v2104
    %v2106 = vrot.slane %v2047, 2
    %v2107 = vrot.slane %v2048, 2
    %v2108 = vsel %vm330, %v2106, %v2107
    %v2133 = vadd.f32 %v1999, %v2075
    %v2134 = vadd.f32 %v2000, %v2074
    %v2135 = vadd.f32 %v2001, %v2078
    %v2136 = vadd.f32 %v2002, %v2077
    %v2137 = vadd.f32 %v2003, %v2081
    %v2138 = vadd.f32 %v2004, %v2080
    %v2139 = vadd.f32 %v2005, %v2084
    %v2140 = vadd.f32 %v2006, %v2083
    %v2141 = vadd.f32 %v2007, %v2087
    %v2142 = vadd.f32 %v2008, %v2086
    %v2143 = vadd.f32 %v2009, %v2090
    %v2144 = vadd.f32 %v2010, %v2089
    %v2145 = vadd.f32 %v2011, %v2093
    %v2146 = vadd.f32 %v2012, %v2092
    %v2147 = vadd.f32 %v2013, %v2096
    %v2148 = vadd.f32 %v2014, %v2095
    %v2149 = vadd.f32 %v2015, %v2099
    %v2150 = vadd.f32 %v2016, %v2098
    %v2151 = vadd.f32 %v2017, %v2102
    %v2152 = vadd.f32 %v2018, %v2101
    %v2153 = vadd.f32 %v2019, %v2105
    %v2154 = vadd.f32 %v2020, %v2104
    %v2155 = vadd.f32 %v2021, %v2108
    %v2156 = vadd.f32 %v2022, %v2107
    %s2157 = sld [smem:[#allocation5]]
    %v2158 = vstv %s2157
    %v2159 = vadd.f32 %v2133, %v2158
    %v2160 = vadd.f32 %v2134, %v2158
    %v2161 = vadd.f32 %v2135, %v2158
    %v2162 = vadd.f32 %v2136, %v2158
    %v2163 = vadd.f32 %v2137, %v2158
    %v2164 = vadd.f32 %v2138, %v2158
    %v2165 = vadd.f32 %v2139, %v2158
    %v2166 = vadd.f32 %v2140, %v2158
    %v2167 = vadd.f32 %v2141, %v2158
    %v2168 = vadd.f32 %v2142, %v2158
    %v2169 = vadd.f32 %v2143, %v2158
    %v2170 = vadd.f32 %v2144, %v2158
    %v2171 = vadd.f32 %v2145, %v2158
    %v2172 = vadd.f32 %v2146, %v2158
    %v2173 = vadd.f32 %v2147, %v2158
    %v2174 = vadd.f32 %v2148, %v2158
    %v2175 = vadd.f32 %v2149, %v2158
    %v2176 = vadd.f32 %v2150, %v2158
    %v2177 = vadd.f32 %v2151, %v2158
    %v2178 = vadd.f32 %v2152, %v2158
    %v2179 = vadd.f32 %v2153, %v2158
    %v2180 = vadd.f32 %v2154, %v2158
    %v2181 = vadd.f32 %v2155, %v2158
    %v2182 = vadd.f32 %v2156, %v2158
    %v2183 = vmax.f32 %v2159, 0.0
    %v2184 = vmax.f32 %v2160, 0.0
    %v2185 = vmax.f32 %v2161, 0.0
    %v2186 = vmax.f32 %v2162, 0.0
    %v2187 = vmax.f32 %v2163, 0.0
    %v2188 = vmax.f32 %v2164, 0.0
    %v2189 = vmax.f32 %v2165, 0.0
    %v2190 = vmax.f32 %v2166, 0.0
    %v2191 = vmax.f32 %v2167, 0.0
    %v2192 = vmax.f32 %v2168, 0.0
    %v2193 = vmax.f32 %v2169, 0.0
    %v2194 = vmax.f32 %v2170, 0.0
    %v2195 = vmax.f32 %v2171, 0.0
    %v2196 = vmax.f32 %v2172, 0.0
    %v2197 = vmax.f32 %v2173, 0.0
    %v2198 = vmax.f32 %v2174, 0.0
    %v2199 = vmax.f32 %v2175, 0.0
    %v2200 = vmax.f32 %v2176, 0.0
    %v2201 = vmax.f32 %v2177, 0.0
    %v2202 = vmax.f32 %v2178, 0.0
    %v2203 = vmax.f32 %v2179, 0.0
    %v2204 = vmax.f32 %v2180, 0.0
    %v2205 = vmax.f32 %v2181, 0.0
    %v2206 = vmax.f32 %v2182, 0.0
    %v2207 = vmax.f32 %v2183, %v2185
    %v2208 = vmax.f32 %v2184, %v2186
    %v2209 = vmax.f32 %v2187, %v2189
    %v2210 = vmax.f32 %v2188, %v2190
    %v2211 = vmax.f32 %v2191, %v2193
    %v2212 = vmax.f32 %v2192, %v2194
    %v2213 = vmax.f32 %v2195, %v2197
    %v2214 = vmax.f32 %v2196, %v2198
    %v2215 = vmax.f32 %v2199, %v2201
    %v2216 = vmax.f32 %v2200, %v2202
    %v2217 = vmax.f32 %v2203, %v2205
    %v2218 = vmax.f32 %v2204, %v2206
    %2219 = vst [vmem:[#allocation2] sm:$0xff] %v2207
    %2220 = vst [vmem:[#allocation2 + $0x8] sm:$0xf] %v2208
    %2221 = vst [vmem:[#allocation2 + $0x10] sm:$0xff] %v2209
    %2222 = vst [vmem:[#allocation2 + $0x18] sm:$0xf] %v2210
    %2223 = vst [vmem:[#allocation2 + $0x20] sm:$0xff] %v2211
    %2224 = vst [vmem:[#allocation2 + $0x28] sm:$0xf] %v2212
    %2225 = vst [vmem:[#allocation2 + $0x30] sm:$0xff] %v2213
    %2226 = vst [vmem:[#allocation2 + $0x38] sm:$0xf] %v2214
    %2227 = vst [vmem:[#allocation2 + $0x40] sm:$0xff] %v2215
    %2228 = vst [vmem:[#allocation2 + $0x48] sm:$0xf] %v2216
    %2229 = vst [vmem:[#allocation2 + $0x50] sm:$0xff] %v2217
    %2230 = vst [vmem:[#allocation2 + $0x58] sm:$0xf] %v2218
    %v2231 = vld [vmem:[#allocation2] ss:$2 sm:$0x3f]
    %s2232 = scalar_lea.vmem [#allocation2], 16
    %v2233 = vld [vmem:[%s2232] ss:$2 sm:$0x3f]
    %s2234 = scalar_lea.vmem [#allocation2], 32
    %v2235 = vld [vmem:[%s2234] ss:$2 sm:$0x3f]
    %s2236 = scalar_lea.vmem [#allocation2], 48
    %v2237 = vld [vmem:[%s2236] ss:$2 sm:$0x3f]
    %s2238 = scalar_lea.vmem [#allocation2], 64
    %v2239 = vld [vmem:[%s2238] ss:$2 sm:$0x3f]
    %s2240 = scalar_lea.vmem [#allocation2], 80
    %v2241 = vld [vmem:[%s2240] ss:$2 sm:$0x3f]
    %s2242 = scalar_lea.vmem [#allocation2], 1
    %v2243 = vld [vmem:[%s2242] ss:$2 sm:$0x3f]
    %s2244 = scalar_lea.vmem [#allocation2], 17
    %v2245 = vld [vmem:[%s2244] ss:$2 sm:$0x3f]
    %s2246 = scalar_lea.vmem [#allocation2], 33
    %v2247 = vld [vmem:[%s2246] ss:$2 sm:$0x3f]
    %s2248 = scalar_lea.vmem [#allocation2], 49
    %v2249 = vld [vmem:[%s2248] ss:$2 sm:$0x3f]
    %s2250 = scalar_lea.vmem [#allocation2], 65
    %v2251 = vld [vmem:[%s2250] ss:$2 sm:$0x3f]
    %s2252 = scalar_lea.vmem [#allocation2], 81
    %v2253 = vld [vmem:[%s2252] ss:$2 sm:$0x3f]
    %v2254 = vmax.f32 %v2231, %v2243
    %v2255 = vmax.f32 %v2233, %v2245
    %v2256 = vmax.f32 %v2235, %v2247
    %v2257 = vmax.f32 %v2237, %v2249
    %v2258 = vmax.f32 %v2239, %v2251
    %v2259 = vmax.f32 %v2241, %v2253
    %2260 = vst [vmem:[#allocation3] sm:$0x3f] %v2254
    %2261 = vst [vmem:[#allocation3 + $0x6] sm:$0x3f] %v2255
    %2262 = vst [vmem:[#allocation3 + $0xc] sm:$0x3f] %v2256
    %2263 = vst [vmem:[#allocation3 + $0x12] sm:$0x3f] %v2257
    %2264 = vst [vmem:[#allocation3 + $0x18] sm:$0x3f] %v2258
    %2265 = vst [vmem:[#allocation3 + $0x1e] sm:$0x3f] %v2259
    %v2266 = vld [vmem:[#allocation3] sm:$0xff]
    %v2267 = vld [vmem:[#allocation3 + $0x8] sm:$0xff]
    %v2268 = vld [vmem:[#allocation3 + $0x10] sm:$0xff]
    %v2269 = vld [vmem:[#allocation3 + $0x18] sm:$0xff]
    %v2270 = vld [vmem:[#allocation3 + $0x20] sm:$0xf]
    %v2271 = vld [vmem:[%s5] sm:$0xff]
    %v2272 = vld [vmem:[%s5 + $0x8] sm:$0xff]
    %v2273 = vld [vmem:[%s5 + $0x10] sm:$0xff]
    %v2274 = vld [vmem:[%s5 + $0x18] sm:$0xff]
    %v2275 = vld [vmem:[%s5 + $0x20] sm:$0xf]
    %v2276 = vld [vmem:[%s6] sm:$0x1]
    %v2278 = vlaneseq
    %v2279 = vshrl.u32 %v2278, 7
    %v2280 = vsub.s32 0, %v2279
    %v2281 = vrot.slane %v2276, %v2280
    %2283 = vxpose.xlu0.b32.start [1/16] %v2266, 128
    %2284 = vxpose.xlu0.b32.cont [2/16] %v2267, 128
    %2285 = vxpose.xlu0.b32.cont [3/16] %v2268, 128
    %2286 = vxpose.xlu0.b32.cont [4/16] %v2269, 128
    %2287 = vxpose.xlu0.b32.cont [5/16] %v2270, 128
    %2288 = vxpose.xlu0.b32.cont [6/16] 0.0, 128
    %2289 = vxpose.xlu0.b32.cont [7/16] 0.0, 128
    %2290 = vxpose.xlu0.b32.cont [8/16] 0.0, 128
    %2291 = vxpose.xlu0.b32.cont [9/16] 0.0, 128
    %2292 = vxpose.xlu0.b32.cont [10/16] 0.0, 128
    %2293 = vxpose.xlu0.b32.cont [11/16] 0.0, 128
    %2294 = vxpose.xlu0.b32.cont [12/16] 0.0, 128
    %2295 = vxpose.xlu0.b32.cont [13/16] 0.0, 128
    %2296 = vxpose.xlu0.b32.cont [14/16] 0.0, 128
    %2297 = vxpose.xlu0.b32.cont [15/16] 0.0, 128
    %2298 = vxpose.xlu0.b32.end [16/16] 0.0, 128
    %v2299 = vpop.trf.xlu0
    %v2300 = vpop.trf.xlu0
    %v2301 = vpop.trf.xlu0
    %v2302 = vpop.trf.xlu0
    %v2303 = vpop.trf.xlu0
    %v2304 = vpop.trf.xlu0
    %v2305 = vpop.trf.xlu0
    %v2306 = vpop.trf.xlu0
    %v2307 = vpop.trf.xlu0
    %v2308 = vpop.trf.xlu0
    %v2309 = vpop.trf.xlu0
    %v2310 = vpop.trf.xlu0
    %v2311 = vpop.trf.xlu0
    %v2312 = vpop.trf.xlu0
    %v2313 = vpop.trf.xlu0
    %v2314 = vpop.trf.xlu0
    %vm2315 = vcmask 293888
    %v2317 = vsel %vm2315, %v2299, 0
    %v2320 = vsel %vm2315, %v2300, 0
    %v2323 = vsel %vm2315, %v2301, 0
    %v2326 = vsel %vm2315, %v2302, 0
    %v2329 = vsel %vm2315, %v2303, 0
    %v2332 = vsel %vm2315, %v2304, 0
    %v2335 = vsel %vm2315, %v2305, 0
    %v2338 = vsel %vm2315, %v2306, 0
    %v2341 = vsel %vm2315, %v2307, 0
    %v2344 = vsel %vm2315, %v2308, 0
    %v2347 = vsel %vm2315, %v2309, 0
    %v2350 = vsel %vm2315, %v2310, 0
    %v2353 = vsel %vm2315, %v2311, 0
    %v2356 = vsel %vm2315, %v2312, 0
    %v2359 = vsel %vm2315, %v2313, 0
    %v2362 = vsel %vm2315, %v2314, 0
    %vm2364 = vcmask 1043456
    %v2366 = vsel %vm2364, %v2275, 0
    %2368 = vmatprep.subr.mxu0 0.0
    %2369 = vmatpush1.msra.mxu0 %v2271
    %2370 = vmatprep.subr.mxu0 0.0
    %2371 = vmatpush1.msra.mxu0 %v2272
    %2372 = vmatprep.subr.mxu0 0.0
    %2373 = vmatpush1.msra.mxu0 %v2273
    %2374 = vmatprep.subr.mxu0 0.0
    %2375 = vmatpush1.msra.mxu0 %v2274
    %2376 = vmatprep.subr.mxu0 0.0
    %2377 = vmatpush1.msra.mxu0 %v2366
    %2378 = vmatprep.subr.mxu0 0.0
    %2379 = vmatpush1.msra.mxu0 0.0
    %2380 = vmatprep.subr.mxu0 0.0
    %2381 = vmatpush1.msra.mxu0 0.0
    %2382 = vmatprep.subr.mxu0 0.0
    %2383 = vmatpush1.msra.mxu0 0.0
    %2384 = vmatprep.subr.mxu0 0.0
    %2385 = vmatpush1.msra.mxu0 0.0
    %2386 = vmatprep.subr.mxu0 0.0
    %2387 = vmatpush1.msra.mxu0 0.0
    %2388 = vmatprep.subr.mxu0 0.0
    %2389 = vmatpush1.msra.mxu0 0.0
    %2390 = vmatprep.subr.mxu0 0.0
    %2391 = vmatpush1.msra.mxu0 0.0
    %2392 = vmatprep.subr.mxu0 0.0
    %2393 = vmatpush1.msra.mxu0 0.0
    %2394 = vmatprep.subr.mxu0 0.0
    %2395 = vmatpush1.msra.mxu0 0.0
    %2396 = vmatprep.subr.mxu0 0.0
    %2397 = vmatpush1.msra.mxu0 0.0
    %2398 = vmatprep.subr.mxu0 0.0
    %2399 = vmatpush1.msra.mxu0 0.0
    %2400 = vmatprep.subr.mxu0 0.0
    %2401 = vmatpush1.msra.mxu0 0.0
    %2402 = vmatprep.subr.mxu0 0.0
    %2403 = vmatpush1.msra.mxu0 0.0
    %2404 = vmatprep.subr.mxu0 0.0
    %2405 = vmatpush1.msra.mxu0 0.0
    %2406 = vmatprep.subr.mxu0 0.0
    %2407 = vmatpush1.msra.mxu0 0.0
    %2408 = vmatprep.subr.mxu0 0.0
    %2409 = vmatpush1.msra.mxu0 0.0
    %2410 = vmatprep.subr.mxu0 0.0
    %2411 = vmatpush1.msra.mxu0 0.0
    %2412 = vmatprep.subr.mxu0 0.0
    %2413 = vmatpush1.msra.mxu0 0.0
    %2414 = vmatprep.subr.mxu0 0.0
    %2415 = vmatpush1.msra.mxu0 0.0
    %2416 = vmatprep.subr.mxu0 0.0
    %2417 = vmatpush1.msra.mxu0 0.0
    %2418 = vmatprep.subr.mxu0 0.0
    %2419 = vmatpush1.msra.mxu0 0.0
    %2420 = vmatprep.subr.mxu0 0.0
    %2421 = vmatpush1.msra.mxu0 0.0
    %2422 = vmatprep.subr.mxu0 0.0
    %2423 = vmatpush1.msra.mxu0 0.0
    %2424 = vmatprep.subr.mxu0 0.0
    %2425 = vmatpush1.msra.mxu0 0.0
    %2426 = vmatprep.subr.mxu0 0.0
    %2427 = vmatpush1.msra.mxu0 0.0
    %2428 = vmatprep.subr.mxu0 0.0
    %2429 = vmatpush1.msra.mxu0 0.0
    %2430 = vmatprep.subr.mxu0 0.0
    %2431 = vmatpush1.msra.mxu0 0.0
    %2432 = vmatprep.mubr.f32.mxu0 0.0
    %2433 = vmatmul.mubr.f32.gmra.mrb[0].mxu0 %v2317
    %v2434 = vpop.f32.mrb[0].mxu0
    %v2435 = vadd.f32 %v2281, %v2434
    %v2436 = vpop.f32.mrb[0].mxu0
    %2437 = vmatprep.mubr.f32.mxu0 0.0
    %2438 = vmatmul.mubr.f32.gmra.mrb[0].mxu0 %v2320
    %v2439 = vpop.f32.mrb[0].mxu0
    %v2440 = vadd.f32 %v2281, %v2439
    %v2441 = vpop.f32.mrb[0].mxu0
    %2442 = vmatprep.mubr.f32.mxu0 0.0
    %2443 = vmatmul.mubr.f32.gmra.mrb[0].mxu0 %v2323
    %v2444 = vpop.f32.mrb[0].mxu0
    %v2445 = vadd.f32 %v2281, %v2444
    %v2446 = vpop.f32.mrb[0].mxu0
    %2447 = vmatprep.mubr.f32.mxu0 0.0
    %2448 = vmatmul.mubr.f32.gmra.mrb[0].mxu0 %v2326
    %v2449 = vpop.f32.mrb[0].mxu0
    %v2450 = vadd.f32 %v2281, %v2449
    %v2451 = vpop.f32.mrb[0].mxu0
    %2452 = vmatprep.mubr.f32.mxu0 0.0
    %2453 = vmatmul.mubr.f32.gmra.mrb[0].mxu0 %v2329
    %v2454 = vpop.f32.mrb[0].mxu0
    %v2455 = vadd.f32 %v2281, %v2454
    %v2456 = vpop.f32.mrb[0].mxu0
    %2457 = vmatprep.mubr.f32.mxu0 0.0
    %2458 = vmatmul.mubr.f32.gmra.mrb[0].mxu0 %v2332
    %v2459 = vpop.f32.mrb[0].mxu0
    %v2460 = vadd.f32 %v2281, %v2459
    %v2461 = vpop.f32.mrb[0].mxu0
    %2462 = vmatprep.mubr.f32.mxu0 0.0
    %2463 = vmatmul.mubr.f32.gmra.mrb[0].mxu0 %v2335
    %v2464 = vpop.f32.mrb[0].mxu0
    %v2465 = vadd.f32 %v2281, %v2464
    %v2466 = vpop.f32.mrb[0].mxu0
    %2467 = vmatprep.mubr.f32.mxu0 0.0
    %2468 = vmatmul.mubr.f32.gmra.mrb[0].mxu0 %v2338
    %v2469 = vpop.f32.mrb[0].mxu0
    %v2470 = vadd.f32 %v2281, %v2469
    %v2471 = vpop.f32.mrb[0].mxu0
    %2472 = vmatprep.mubr.f32.mxu0 0.0
    %2473 = vmatmul.mubr.f32.gmra.mrb[0].mxu0 %v2341
    %v2474 = vpop.f32.mrb[0].mxu0
    %v2475 = vadd.f32 %v2281, %v2474
    %v2476 = vpop.f32.mrb[0].mxu0
    %2477 = vmatprep.mubr.f32.mxu0 0.0
    %2478 = vmatmul.mubr.f32.gmra.mrb[0].mxu0 %v2344
    %v2479 = vpop.f32.mrb[0].mxu0
    %v2480 = vadd.f32 %v2281, %v2479
    %v2481 = vpop.f32.mrb[0].mxu0
    %2482 = vmatprep.mubr.f32.mxu0 0.0
    %2483 = vmatmul.mubr.f32.gmra.mrb[0].mxu0 %v2347
    %v2484 = vpop.f32.mrb[0].mxu0
    %v2485 = vadd.f32 %v2281, %v2484
    %v2486 = vpop.f32.mrb[0].mxu0
    %2487 = vmatprep.mubr.f32.mxu0 0.0
    %2488 = vmatmul.mubr.f32.gmra.mrb[0].mxu0 %v2350
    %v2489 = vpop.f32.mrb[0].mxu0
    %v2490 = vadd.f32 %v2281, %v2489
    %v2491 = vpop.f32.mrb[0].mxu0
    %2492 = vmatprep.mubr.f32.mxu0 0.0
    %2493 = vmatmul.mubr.f32.gmra.mrb[0].mxu0 %v2353
    %v2494 = vpop.f32.mrb[0].mxu0
    %v2495 = vadd.f32 %v2281, %v2494
    %v2496 = vpop.f32.mrb[0].mxu0
    %2497 = vmatprep.mubr.f32.mxu0 0.0
    %2498 = vmatmul.mubr.f32.gmra.mrb[0].mxu0 %v2356
    %v2499 = vpop.f32.mrb[0].mxu0
    %v2500 = vadd.f32 %v2281, %v2499
    %v2501 = vpop.f32.mrb[0].mxu0
    %2502 = vmatprep.mubr.f32.mxu0 0.0
    %2503 = vmatmul.mubr.f32.gmra.mrb[0].mxu0 %v2359
    %v2504 = vpop.f32.mrb[0].mxu0
    %v2505 = vadd.f32 %v2281, %v2504
    %v2506 = vpop.f32.mrb[0].mxu0
    %2507 = vmatprep.mubr.f32.mxu0 0.0
    %2508 = vmatmul.mubr.f32.gmra.mrb[0].mxu0 %v2362
    %v2509 = vpop.f32.mrb[0].mxu0
    %v2510 = vadd.f32 %v2281, %v2509
    %v2511 = vpop.f32.mrb[0].mxu0
    %2512 = vdwg.mxu0
    %2513 = vst [vmem:[%s7] sm:$0xff] %v2435
    %2514 = vst [vmem:[%s7 + $0x8] sm:$0xff] %v2440
    %2515 = vst [vmem:[%s7 + $0x10] sm:$0xff] %v2445
    %2516 = vst [vmem:[%s7 + $0x18] sm:$0xff] %v2450
    %2517 = vst [vmem:[%s7 + $0x20] sm:$0xff] %v2455
    %2518 = vst [vmem:[%s7 + $0x28] sm:$0xff] %v2460
    %2519 = vst [vmem:[%s7 + $0x30] sm:$0xff] %v2465
    %2520 = vst [vmem:[%s7 + $0x38] sm:$0xff] %v2470
    %2521 = vst [vmem:[%s7 + $0x40] sm:$0xff] %v2475
    %2522 = vst [vmem:[%s7 + $0x48] sm:$0xff] %v2480
    %2523 = vst [vmem:[%s7 + $0x50] sm:$0xff] %v2485
    %2524 = vst [vmem:[%s7 + $0x58] sm:$0xff] %v2490
    %2525 = vst [vmem:[%s7 + $0x60] sm:$0xff] %v2495
    %2526 = vst [vmem:[%s7 + $0x68] sm:$0xff] %v2500
    %2527 = vst [vmem:[%s7 + $0x70] sm:$0xff] %v2505
    %2528 = vst [vmem:[%s7 + $0x78] sm:$0xff] %v2510
    // Predicated region
    $region38: #{_embed_batch.1} parent=1 // pred_check
      _
    $region39: #{_embed_batch.1} parent=1 // pred_check_branch
      %2530 = sbr.rel (0) target = $region41
    $region40: #{_embed_batch.1} parent=1 // pred_region
      _
    $region41: #{_embed_batch.1} parent=1 // pred_fallthru
      _
    // Predicated region
    $region42: #{_embed_batch.1} parent=1 // pred_check
      _
    $region43: #{_embed_batch.1} parent=1 // pred_check_branch
      %2532 = sbr.rel (0) target = $region45
    $region44: #{_embed_batch.1} parent=1 // pred_region
      _
    $region45: #{_embed_batch.1} parent=1 // pred_fallthru
      _
    %2533 = vsyncpa [#allocation7], 1
    %2534 = vsyncpa [#allocation9], 1

</llo_original>
